<compile_context>
chip_gen: v5e
topology: v5e:2x2
jax: 0.10.0
libtpu: 0.0.40
codegen_flags: <defaults>
</compile_context>

<pallas_src>
import functools

import jax
import jax.numpy as jnp
from jax.experimental import pallas as pl
from jax.experimental.pallas import tpu as pltpu

LANE = 128  # lane width: classifier output is padded to this for a lane-dense store


# ----------------------------------------------------------------------------
# Fused encoder kernel (grid axis = transformer layer)
# ----------------------------------------------------------------------------
def _encoder_kernel(
    # inputs (resident)
    emb_ref, bias_ref, eg_ref, eb_ref,
    # inputs (streamed per layer, leading block dim 1)
    wqkv_ref, bqkv_ref, wo_ref, bo_ref,
    ln1g_ref, ln1b_ref, w1_ref, b1_ref, w2_ref, b2_ref, ln2g_ref, ln2b_ref,
    # inputs (resident, used only at the last layer)
    poolw_ref, poolb_ref, fcw_ref, fcb_ref,
    # outputs
    seq_ref, pooled_ref, logits_ref,
    # scratch: residual stream, persists across grid (layer) iterations
    x_ref,
    *, num_heads, batch, seq_len, eps):
    H = x_ref.shape[-1]
    Dh = H // num_heads
    layer = pl.program_id(0)
    n_layers = pl.num_programs(0)

    def layernorm(h, g, b):
        mu = jnp.mean(h, axis=-1, keepdims=True)
        var = jnp.mean(jnp.square(h - mu), axis=-1, keepdims=True)
        return (h - mu) * jax.lax.rsqrt(var + eps) * g + b

    def matmul(x, w_bf16):
        # bf16 MXU inputs (weights already stored bf16), f32 accumulation.
        return jnp.dot(x.astype(jnp.bfloat16), w_bf16,
                       preferred_element_type=jnp.float32)

    # ---- layer 0: embedding LayerNorm initializes the resident residual stream ----
    @pl.when(layer == 0)
    def _():
        x_ref[...] = layernorm(emb_ref[...], eg_ref[...], eb_ref[...])

    x = x_ref[...]                                           # (B*S, H) f32

    # ---- self-attention: fused QKV projection (1/sqrt(Dh) pre-folded into Q weights) ----
    qkv = matmul(x, wqkv_ref[0]) + bqkv_ref[0]               # (B*S, 3H) f32

    def split_heads(col_off):
        # (B*S, 3H) column slab -> (nH*B, S, Dh) bf16, rows ordered (head, batch, seq);
        # leading-dim reshapes/stacks only (no lane relayout of the minor dim).
        pieces = [
            qkv[:, col_off + h * Dh: col_off + (h + 1) * Dh].reshape(batch, seq_len, Dh)
            for h in range(num_heads)
        ]
        return jnp.concatenate(pieces, axis=0).astype(jnp.bfloat16)

    q = split_heads(0)
    k = split_heads(H)
    v = split_heads(2 * H)

    # Single batched attention over ALL heads (einsum batch dim = heads x batch).
    s = jnp.einsum('bqd,bkd->bqk', q, k, preferred_element_type=jnp.float32)
    s = s + bias_ref[...]                                    # (nH*B, S, S) + (nH*B, 1, S)
    s = s - jnp.max(s, axis=-1, keepdims=True)
    p = jnp.exp(s)
    p = p * pl.reciprocal(jnp.sum(p, axis=-1, keepdims=True), approx=True)
    ctx = jnp.einsum('bqk,bkd->bqd', p.astype(jnp.bfloat16), v,
                     preferred_element_type=jnp.float32)     # (nH*B, S, Dh)

    # Merge heads back into head-major feature columns: (nH*B, S, Dh) -> (B*S, H).
    ctx = ctx.reshape(num_heads, batch, seq_len, Dh)
    ctx = jnp.concatenate([ctx[h] for h in range(num_heads)], axis=-1)
    ctx = ctx.reshape(batch * seq_len, H)

    attn_out = matmul(ctx, wo_ref[0]) + bo_ref[0]
    x = layernorm(attn_out + x, ln1g_ref[0], ln1b_ref[0])

    # ---- feed-forward ----
    hdn = matmul(x, w1_ref[0]) + b1_ref[0]
    # TODO(synk): HuggingFace/PyTorch BERT defaults to the exact (erf) GELU; the tanh
    # approximation is used here to keep the transcendental on the EUP.
    hdn = jax.nn.gelu(hdn, approximate=True)
    ffn = matmul(hdn, w2_ref[0]) + b2_ref[0]
    x = layernorm(ffn + x, ln2g_ref[0], ln2b_ref[0])

    x_ref[...] = x                                           # carry residual to next layer

    # ---- last layer: sequence output + pooler + classifier ----
    @pl.when(layer == n_layers - 1)
    def _():
        seq_ref[...] = x.astype(seq_ref.dtype)               # (B*S, H), lane-dense
        # CLS rows: the leading-dim reshape is a free re-indexing (no copy) and the slice
        # reads only the B CLS rows.
        cls = x.reshape(batch, seq_len, H)[:, 0, :]          # (B, H)
        pooled = jnp.tanh(matmul(cls, poolw_ref[...]) + poolb_ref[...])
        pooled_ref[...] = pooled.astype(pooled_ref.dtype)
        logits = matmul(pooled, fcw_ref[...]) + fcb_ref[...]  # (B, LANE) lane-dense
        logits_ref[...] = logits.astype(logits_ref.dtype)


# ----------------------------------------------------------------------------
# BlockSpec helpers
# ----------------------------------------------------------------------------
def _resident_spec(arr):
    """Whole array resident in VMEM; same block for every layer step (fetched once)."""
    nd = arr.ndim
    return pl.BlockSpec(tuple(arr.shape), lambda l, _nd=nd: (0,) * _nd)


def _layer_spec(arr):
    """Per-layer slab of a (L, ...) stacked parameter, streamed/double-buffered by Pallas."""
    nd = arr.ndim
    blk = (1,) + tuple(arr.shape[1:])
    return pl.BlockSpec(blk, lambda l, _nd=nd: (l,) + (0,) * (_nd - 1))


# ----------------------------------------------------------------------------
# One pallas_call for the whole encoder + pooler + classifier
# ----------------------------------------------------------------------------
def bert_encoder_fused(emb, mask_bias, params, *, batch, seq_len, eps=1e-12):
    H = emb.shape[-1]
    L = params["wqkv"].shape[0]
    nH = params["num_heads"]
    Dh = H // nH
    inter = params["w1"].shape[-1]
    npad = params["fc_w_pad"].shape[1]
    BS = batch * seq_len

    inputs = (
        emb, mask_bias,
        params["emb_ln_g"], params["emb_ln_b"],
        params["wqkv"], params["bqkv"], params["wo"], params["bo"],
        params["ln1_g"], params["ln1_b"], params["w1"], params["b1"],
        params["w2"], params["b2"], params["ln2_g"], params["ln2_b"],
        params["pool_w"], params["pool_b"], params["fc_w_pad"], params["fc_b_pad"],
    )
    # True -> stacked per layer (leading dim L), streamed through the layer grid axis.
    streamed = (False, False, False, False,
                True, True, True, True,
                True, True, True, True, True, True, True, True,
                False, False, False, False)
    in_specs = [(_layer_spec(a) if s else _resident_spec(a))
                for a, s in zip(inputs, streamed)]

    out_shapes = (
        jax.ShapeDtypeStruct((BS, H), jnp.float32),          # sequence output
        jax.ShapeDtypeStruct((batch, H), jnp.float32),       # pooled output
        jax.ShapeDtypeStruct((batch, npad), jnp.float32),    # lane-padded logits
    )
    out_specs = (
        pl.BlockSpec((BS, H), lambda l: (0, 0)),
        pl.BlockSpec((batch, H), lambda l: (0, 0)),
        pl.BlockSpec((batch, npad), lambda l: (0, 0)),
    )

    # Advisory cost hint so XLA schedules the embedding gathers around the long custom call.
    flops = L * (2 * BS * H * 3 * H            # fused QKV projection
                 + 4 * nH * batch * seq_len * seq_len * Dh   # QK^T + PV
                 + 2 * BS * H * H              # output projection
                 + 4 * BS * H * inter)         # FFN up + down
    flops += 2 * batch * H * H + 2 * batch * H * npad
    transcendentals = L * (nH * batch * seq_len * seq_len + BS * inter) + batch * H
    in_bytes = int(sum(a.size * a.dtype.itemsize for a in inputs))
    out_bytes = 4 * (BS * H + batch * H + batch * npad)

    # TODO(synk): at real BERT-base scale (H=768, S=512, B>=8) add a "parallel" row-tile grid
    # axis over B*S (256-512 rows/block) so activations tile under v7x's 64 MiB VMEM and the
    # matmuls shard across its two TensorCores; bump vmem_limit_bytes (~96 MiB) on v6e.
    return pl.pallas_call(
        functools.partial(
            _encoder_kernel,
            num_heads=nH, batch=batch, seq_len=seq_len, eps=eps),
        grid=(L,),
        in_specs=in_specs,
        out_specs=out_specs,
        out_shape=out_shapes,
        scratch_shapes=[pltpu.VMEM((BS, H), jnp.float32)],   # residual stream accumulator
        compiler_params=pltpu.CompilerParams(
            dimension_semantics=("arbitrary",),              # residual carried layer -> layer
            vmem_limit_bytes=64 * 1024 * 1024,
        ),
        cost_estimate=pl.CostEstimate(
            flops=int(flops),
            transcendentals=int(transcendentals),
            bytes_accessed=in_bytes + out_bytes),
    )(*inputs)


# ----------------------------------------------------------------------------
# Parameter initialization (deterministic, synthetic — not a checkpoint load)
# ----------------------------------------------------------------------------
def init_params(key, *, vocab=50, type_vocab=2, max_pos=16, hidden=128,
                num_heads=2, intermediate=512, num_layers=2, class_num=3,
                class_pad=LANE):
    def nrm(k, shape, std=0.02):
        return std * jax.random.normal(k, shape, dtype=jnp.float32)

    H, I, L = hidden, intermediate, num_layers
    Dh = H // num_heads
    scale = 1.0 / float(Dh) ** 0.5
    keys = iter(jax.random.split(key, 6 * L + 8))

    wqkv, wo, w1, w2 = [], [], [], []
    for _ in range(L):
        # 1/sqrt(Dh) attention scale folded into the Q projection weights (Q bias is zero,
        # otherwise it would be scaled as well).
        wq = nrm(next(keys), (H, H)) * scale
        wk = nrm(next(keys), (H, H))
        wv = nrm(next(keys), (H, H))
        wqkv.append(jnp.concatenate([wq, wk, wv], axis=1))          # fused (H, 3H)
        wo.append(nrm(next(keys), (H, H)))
        w1.append(nrm(next(keys), (H, I)))
        w2.append(nrm(next(keys), (I, H)))

    fc_w = nrm(next(keys), (H, class_num))
    fc_w_pad = jnp.zeros((H, class_pad), jnp.float32).at[:, :class_num].set(fc_w)

    bf16 = jnp.bfloat16
    return {
        "num_heads": num_heads,
        "class_num": class_num,
        "word_emb": nrm(next(keys), (vocab, H)),
        "type_emb": nrm(next(keys), (type_vocab, H)),
        "pos_emb": nrm(next(keys), (max_pos, H)),
        "emb_ln_g": jnp.ones((1, H), jnp.float32),
        "emb_ln_b": jnp.zeros((1, H), jnp.float32),
        # Matmul weights stored in bf16: half the HBM->VMEM DMA bytes / VMEM residency.
        "wqkv": jnp.stack(wqkv).astype(bf16),                       # (L, H, 3H)
        "bqkv": jnp.zeros((L, 1, 3 * H), jnp.float32),
        "wo": jnp.stack(wo).astype(bf16),
        "bo": jnp.zeros((L, 1, H), jnp.float32),
        "ln1_g": jnp.ones((L, 1, H), jnp.float32),
        "ln1_b": jnp.zeros((L, 1, H), jnp.float32),
        "w1": jnp.stack(w1).astype(bf16),
        "b1": jnp.zeros((L, 1, I), jnp.float32),
        "w2": jnp.stack(w2).astype(bf16),
        "b2": jnp.zeros((L, 1, H), jnp.float32),
        "ln2_g": jnp.ones((L, 1, H), jnp.float32),
        "ln2_b": jnp.zeros((L, 1, H), jnp.float32),
        "pool_w": nrm(next(keys), (H, H)).astype(bf16),
        "pool_b": jnp.zeros((1, H), jnp.float32),
        "fc_w_pad": fc_w_pad.astype(bf16),
        "fc_b_pad": jnp.zeros((1, class_pad), jnp.float32),
    }


# ----------------------------------------------------------------------------
# Forward pass: embedding gathers in XLA glue, everything else in the fused kernel
# ----------------------------------------------------------------------------
def bert_classficator_forward(params, text, token, mask):
    B, S = text.shape
    H = params["word_emb"].shape[1]
    nH = params["num_heads"]

    pos = jnp.arange(S)
    emb = (params["word_emb"][text]
           + params["type_emb"][token]
           + params["pos_emb"][pos][None, :, :])                    # (B, S, H)
    emb = emb.reshape(B * S, H)

    # Additive attention-mask bias, materialized ONCE here and already broadcast over heads
    # (rows ordered (head, batch) to match the kernel's head-batched attention layout).
    bias = (1.0 - mask.astype(jnp.float32)) * -1e9                  # (B, S)
    bias = jnp.broadcast_to(bias[None, :, None, :], (nH, B, 1, S)).reshape(nH * B, 1, S)

    seq, pooled, logits_pad = bert_encoder_fused(emb, bias, params,
                                                 batch=B, seq_len=S)

    sequence_output = seq.reshape(B, S, H)
    res = logits_pad[:, :params["class_num"]]                       # slice off lane padding
    return res, (sequence_output, pooled)


# ----------------------------------------------------------------------------
if __name__ == "__main__":
    B, S, H, nH, INTER, LAYERS, VOCAB, CLASSES = 2, 8, 128, 2, 512, 2, 50, 3

    key = jax.random.PRNGKey(0)
    kp, kt, km = jax.random.split(key, 3)

    params = init_params(kp, vocab=VOCAB, max_pos=S * 2, hidden=H,
                         num_heads=nH, intermediate=INTER,
                         num_layers=LAYERS, class_num=CLASSES)

    text = jax.random.randint(kt, (B, S), 0, VOCAB, dtype=jnp.int32)
    token = jnp.zeros((B, S), dtype=jnp.int32)
    mask = jnp.ones((B, S), dtype=jnp.int32).at[1, 6:].set(0)   # some padding in batch 1

    # Single compiled executable: weights are constants, one pallas_call inside.
    forward = jax.jit(functools.partial(bert_classficator_forward, params))
    res, y = forward(text, token, mask)
    jax.block_until_ready((res, y))

    assert res.shape == (B, CLASSES)
    assert y[0].shape == (B, S, H) and y[1].shape == (B, H)
    assert jnp.all(jnp.isfinite(res)) and jnp.all(jnp.isfinite(y[0])) and jnp.all(jnp.isfinite(y[1]))
    print("KERNEL_OK")
</pallas_src>

<mosaic_0001>
module attributes {stable_mosaic.version = 11 : i64} {
  func.func @_encoder_kernel(%arg0: i32, %arg1: memref<16x128xf32, #tpu.memory_space<vmem>>, %arg2: memref<4x1x8xf32, #tpu.memory_space<vmem>>, %arg3: memref<1x128xf32, #tpu.memory_space<vmem>>, %arg4: memref<1x128xf32, #tpu.memory_space<vmem>>, %arg5: memref<1x128x384xbf16, #tpu.memory_space<vmem>>, %arg6: memref<1x1x384xf32, #tpu.memory_space<vmem>>, %arg7: memref<1x128x128xbf16, #tpu.memory_space<vmem>>, %arg8: memref<1x1x128xf32, #tpu.memory_space<vmem>>, %arg9: memref<1x1x128xf32, #tpu.memory_space<vmem>>, %arg10: memref<1x1x128xf32, #tpu.memory_space<vmem>>, %arg11: memref<1x128x512xbf16, #tpu.memory_space<vmem>>, %arg12: memref<1x1x512xf32, #tpu.memory_space<vmem>>, %arg13: memref<1x512x128xbf16, #tpu.memory_space<vmem>>, %arg14: memref<1x1x128xf32, #tpu.memory_space<vmem>>, %arg15: memref<1x1x128xf32, #tpu.memory_space<vmem>>, %arg16: memref<1x1x128xf32, #tpu.memory_space<vmem>>, %arg17: memref<128x128xbf16, #tpu.memory_space<vmem>>, %arg18: memref<1x128xf32, #tpu.memory_space<vmem>>, %arg19: memref<128x128xbf16, #tpu.memory_space<vmem>>, %arg20: memref<1x128xf32, #tpu.memory_space<vmem>>, %arg21: memref<16x128xf32, #tpu.memory_space<vmem>>, %arg22: memref<2x128xf32, #tpu.memory_space<vmem>>, %arg23: memref<2x128xf32, #tpu.memory_space<vmem>>, %arg24: memref<16x128xf32, #tpu.memory_space<vmem>>) attributes {dimension_semantics = [#tpu.dimension_semantics<arbitrary>], iteration_bounds = array<i64: 2>, scalar_prefetch = 0 : i64, scratch_operands = 1 : i64, tpu.core_type = #tpu.core_type<tc>, window_params = [{pipeline_mode = #tpu.pipeline_mode<synchronous>, transform_indices = @transform_0, window_bounds = array<i64: 16, 128>}, {pipeline_mode = #tpu.pipeline_mode<synchronous>, transform_indices = @transform_1, window_bounds = array<i64: 4, 1, 8>}, {pipeline_mode = #tpu.pipeline_mode<synchronous>, transform_indices = @transform_2, window_bounds = array<i64: 1, 128>}, {pipeline_mode = #tpu.pipeline_mode<synchronous>, transform_indices = @transform_3, window_bounds = array<i64: 1, 128>}, {transform_indices = @transform_4, window_bounds = array<i64: 1, 128, 384>}, {transform_indices = @transform_5, window_bounds = array<i64: 1, 1, 384>}, {transform_indices = @transform_6, window_bounds = array<i64: 1, 128, 128>}, {transform_indices = @transform_7, window_bounds = array<i64: 1, 1, 128>}, {transform_indices = @transform_8, window_bounds = array<i64: 1, 1, 128>}, {transform_indices = @transform_9, window_bounds = array<i64: 1, 1, 128>}, {transform_indices = @transform_10, window_bounds = array<i64: 1, 128, 512>}, {transform_indices = @transform_11, window_bounds = array<i64: 1, 1, 512>}, {transform_indices = @transform_12, window_bounds = array<i64: 1, 512, 128>}, {transform_indices = @transform_13, window_bounds = array<i64: 1, 1, 128>}, {transform_indices = @transform_14, window_bounds = array<i64: 1, 1, 128>}, {transform_indices = @transform_15, window_bounds = array<i64: 1, 1, 128>}, {pipeline_mode = #tpu.pipeline_mode<synchronous>, transform_indices = @transform_16, window_bounds = array<i64: 128, 128>}, {pipeline_mode = #tpu.pipeline_mode<synchronous>, transform_indices = @transform_17, window_bounds = array<i64: 1, 128>}, {pipeline_mode = #tpu.pipeline_mode<synchronous>, transform_indices = @transform_18, window_bounds = array<i64: 128, 128>}, {pipeline_mode = #tpu.pipeline_mode<synchronous>, transform_indices = @transform_19, window_bounds = array<i64: 1, 128>}, {pipeline_mode = #tpu.pipeline_mode<synchronous>, transform_indices = @transform_20, window_bounds = array<i64: 16, 128>}, {pipeline_mode = #tpu.pipeline_mode<synchronous>, transform_indices = @transform_21, window_bounds = array<i64: 2, 128>}, {pipeline_mode = #tpu.pipeline_mode<synchronous>, transform_indices = @transform_22, window_bounds = array<i64: 2, 128>}]} {
    %c0_i32 = arith.constant 0 : i32
    %0 = arith.cmpi eq, %arg0, %c0_i32 : i32
    %1 = arith.extui %0 : i1 to i32
    %c0_i32_0 = arith.constant 0 : i32
    %2 = arith.cmpi ne, %1, %c0_i32_0 : i32
    scf.if %2 {
      %c0_65 = arith.constant 0 : index
      %c0_66 = arith.constant 0 : index
      %148 = vector.load %arg1[%c0_65, %c0_66] : memref<16x128xf32, #tpu.memory_space<vmem>>, vector<16x128xf32>
      %c0_67 = arith.constant 0 : index
      %c0_68 = arith.constant 0 : index
      %149 = vector.load %arg3[%c0_67, %c0_68] : memref<1x128xf32, #tpu.memory_space<vmem>>, vector<1x128xf32>
      %c0_69 = arith.constant 0 : index
      %c0_70 = arith.constant 0 : index
      %150 = vector.load %arg4[%c0_69, %c0_70] : memref<1x128xf32, #tpu.memory_space<vmem>>, vector<1x128xf32>
      %cst_71 = arith.constant dense<0.000000e+00> : vector<16xf32>
      %151 = vector.multi_reduction <add>, %148, %cst_71 [1] : vector<16x128xf32> to vector<16xf32>
      %152 = vector.shape_cast %151 : vector<16xf32> to vector<16x1xf32>
      %cst_72 = arith.constant 1.280000e+02 : f32
      %153 = vector.broadcast %cst_72 : f32 to vector<16x1xf32>
      %154 = arith.divf %152, %153 : vector<16x1xf32>
      %155 = vector.broadcast %154 : vector<16x1xf32> to vector<16x128xf32>
      %156 = arith.subf %148, %155 : vector<16x128xf32>
      %157 = arith.mulf %156, %156 : vector<16x128xf32>
      %cst_73 = arith.constant dense<0.000000e+00> : vector<16xf32>
      %158 = vector.multi_reduction <add>, %157, %cst_73 [1] : vector<16x128xf32> to vector<16xf32>
      %159 = vector.shape_cast %158 : vector<16xf32> to vector<16x1xf32>
      %cst_74 = arith.constant 1.280000e+02 : f32
      %160 = vector.broadcast %cst_74 : f32 to vector<16x1xf32>
      %161 = arith.divf %159, %160 : vector<16x1xf32>
      %162 = vector.broadcast %154 : vector<16x1xf32> to vector<16x128xf32>
      %163 = arith.subf %148, %162 : vector<16x128xf32>
      %cst_75 = arith.constant 9.99999996E-13 : f32
      %164 = vector.broadcast %cst_75 : f32 to vector<16x1xf32>
      %165 = arith.addf %161, %164 : vector<16x1xf32>
      %166 = math.rsqrt %165 : vector<16x1xf32>
      %167 = vector.broadcast %166 : vector<16x1xf32> to vector<16x128xf32>
      %168 = arith.mulf %163, %167 : vector<16x128xf32>
      %169 = vector.broadcast %149 : vector<1x128xf32> to vector<16x128xf32>
      %170 = arith.mulf %168, %169 : vector<16x128xf32>
      %171 = vector.broadcast %150 : vector<1x128xf32> to vector<16x128xf32>
      %172 = arith.addf %170, %171 : vector<16x128xf32>
      %c0_76 = arith.constant 0 : index
      %c0_77 = arith.constant 0 : index
      %173 = vector.load %arg24[%c0_76, %c0_77] : memref<16x128xf32, #tpu.memory_space<vmem>>, vector<16x128xf32>
      tpu.vector_store %arg24[%c0_76, %c0_77], %172 {strides = array<i32>} : memref<16x128xf32, #tpu.memory_space<vmem>>, vector<16x128xf32>,
    } else {
    }
    %c0 = arith.constant 0 : index
    %c0_1 = arith.constant 0 : index
    %3 = vector.load %arg24[%c0, %c0_1] : memref<16x128xf32, #tpu.memory_space<vmem>>, vector<16x128xf32>
    %c0_2 = arith.constant 0 : index
    %c0_3 = arith.constant 0 : index
    %c0_4 = arith.constant 0 : index
    %4 = vector.load %arg5[%c0_2, %c0_3, %c0_4] : memref<1x128x384xbf16, #tpu.memory_space<vmem>>, vector<1x128x384xbf16>
    %5 = vector.shape_cast %4 : vector<1x128x384xbf16> to vector<128x384xbf16>
    %6 = arith.truncf %3 : vector<16x128xf32> to vector<16x128xbf16>
    %cst = arith.constant dense<0.000000e+00> : vector<16x384xf32>
    %7 = tpu.matmul %6, %5, %cst {dimension_numbers = #tpu.dot_dimension_numbers<[1], [0], [0], [1], [0, 0, 1, 1], [], []>} : vector<16x128xbf16>, vector<128x384xbf16>, vector<16x384xf32> -> vector<16x384xf32>
    %c0_5 = arith.constant 0 : index
    %c0_6 = arith.constant 0 : index
    %c0_7 = arith.constant 0 : index
    %8 = vector.load %arg6[%c0_5, %c0_6, %c0_7] : memref<1x1x384xf32, #tpu.memory_space<vmem>>, vector<1x1x384xf32>
    %9 = vector.shape_cast %8 : vector<1x1x384xf32> to vector<1x384xf32>
    %10 = vector.broadcast %9 : vector<1x384xf32> to vector<16x384xf32>
    %11 = arith.addf %7, %10 : vector<16x384xf32>
    %12 = vector.extract_strided_slice %11 {offsets = [0, 0], sizes = [16, 64], strides = [1, 1]} : vector<16x384xf32> to vector<16x64xf32>
    %13 = vector.shape_cast %12 : vector<16x64xf32> to vector<2x8x64xf32>
    %14 = vector.extract_strided_slice %11 {offsets = [0, 64], sizes = [16, 64], strides = [1, 1]} : vector<16x384xf32> to vector<16x64xf32>
    %15 = vector.shape_cast %14 : vector<16x64xf32> to vector<2x8x64xf32>
    %16 = tpu.concatenate %13, %15 in 0 : vector<2x8x64xf32>, vector<2x8x64xf32> -> vector<4x8x64xf32>
    %17 = arith.truncf %16 : vector<4x8x64xf32> to vector<4x8x64xbf16>
    %18 = vector.extract_strided_slice %11 {offsets = [0, 128], sizes = [16, 64], strides = [1, 1]} : vector<16x384xf32> to vector<16x64xf32>
    %19 = vector.shape_cast %18 : vector<16x64xf32> to vector<2x8x64xf32>
    %20 = vector.extract_strided_slice %11 {offsets = [0, 192], sizes = [16, 64], strides = [1, 1]} : vector<16x384xf32> to vector<16x64xf32>
    %21 = vector.shape_cast %20 : vector<16x64xf32> to vector<2x8x64xf32>
    %22 = tpu.concatenate %19, %21 in 0 : vector<2x8x64xf32>, vector<2x8x64xf32> -> vector<4x8x64xf32>
    %23 = arith.truncf %22 : vector<4x8x64xf32> to vector<4x8x64xbf16>
    %24 = vector.extract_strided_slice %11 {offsets = [0, 256], sizes = [16, 64], strides = [1, 1]} : vector<16x384xf32> to vector<16x64xf32>
    %25 = vector.shape_cast %24 : vector<16x64xf32> to vector<2x8x64xf32>
    %26 = vector.extract_strided_slice %11 {offsets = [0, 320], sizes = [16, 64], strides = [1, 1]} : vector<16x384xf32> to vector<16x64xf32>
    %27 = vector.shape_cast %26 : vector<16x64xf32> to vector<2x8x64xf32>
    %28 = tpu.concatenate %25, %27 in 0 : vector<2x8x64xf32>, vector<2x8x64xf32> -> vector<4x8x64xf32>
    %29 = arith.truncf %28 : vector<4x8x64xf32> to vector<4x8x64xbf16>
    "tpu.trace_start"() <{level = 10 : i32, message = "bqd,bkd->bqk"}> : () -> ()
    %cst_8 = arith.constant dense<0.000000e+00> : vector<4x8x8xf32>
    %30 = tpu.matmul %17, %23, %cst_8 {dimension_numbers = #tpu.dot_dimension_numbers<[2], [2], [1], [1], [0, 0, 0, 1, 1, 1], [0], [0]>} : vector<4x8x64xbf16>, vector<4x8x64xbf16>, vector<4x8x8xf32> -> vector<4x8x8xf32>
    "tpu.trace_stop"() : () -> ()
    %c0_9 = arith.constant 0 : index
    %c0_10 = arith.constant 0 : index
    %c0_11 = arith.constant 0 : index
    %31 = vector.load %arg2[%c0_9, %c0_10, %c0_11] : memref<4x1x8xf32, #tpu.memory_space<vmem>>, vector<4x1x8xf32>
    %32 = vector.broadcast %31 : vector<4x1x8xf32> to vector<4x8x8xf32>
    %33 = arith.addf %30, %32 : vector<4x8x8xf32>
    %cst_12 = arith.constant dense<0xFF800000> : vector<4x8xf32>
    %34 = vector.multi_reduction <maximumf>, %33, %cst_12 [2] : vector<4x8x8xf32> to vector<4x8xf32>
    %35 = vector.shape_cast %34 : vector<4x8xf32> to vector<4x8x1xf32>
    %36 = vector.broadcast %35 : vector<4x8x1xf32> to vector<4x8x8xf32>
    %37 = arith.subf %33, %36 : vector<4x8x8xf32>
    %38 = math.exp %37 : vector<4x8x8xf32>
    %cst_13 = arith.constant dense<0.000000e+00> : vector<4x8xf32>
    %39 = vector.multi_reduction <add>, %38, %cst_13 [2] : vector<4x8x8xf32> to vector<4x8xf32>
    %40 = vector.shape_cast %39 : vector<4x8xf32> to vector<4x8x1xf32>
    %41 = tpu.reciprocal %40 {approx = true} : vector<4x8x1xf32> -> vector<4x8x1xf32>
    %42 = vector.broadcast %41 : vector<4x8x1xf32> to vector<4x8x8xf32>
    %43 = arith.mulf %38, %42 : vector<4x8x8xf32>
    %44 = arith.truncf %43 : vector<4x8x8xf32> to vector<4x8x8xbf16>
    "tpu.trace_start"() <{level = 10 : i32, message = "bqk,bkd->bqd"}> : () -> ()
    %cst_14 = arith.constant dense<0.000000e+00> : vector<4x8x64xf32>
    %45 = tpu.matmul %44, %29, %cst_14 {dimension_numbers = #tpu.dot_dimension_numbers<[2], [1], [1], [2], [0, 0, 0, 1, 1, 2], [0], [0]>} : vector<4x8x8xbf16>, vector<4x8x64xbf16>, vector<4x8x64xf32> -> vector<4x8x64xf32>
    "tpu.trace_stop"() : () -> ()
    %46 = vector.shape_cast %45 : vector<4x8x64xf32> to vector<2x2x8x64xf32>
    %47 = vector.extract_strided_slice %46 {offsets = [0, 0, 0, 0], sizes = [1, 2, 8, 64], strides = [1, 1, 1, 1]} : vector<2x2x8x64xf32> to vector<1x2x8x64xf32>
    %48 = vector.shape_cast %47 : vector<1x2x8x64xf32> to vector<2x8x64xf32>
    %49 = vector.extract_strided_slice %46 {offsets = [1, 0, 0, 0], sizes = [1, 2, 8, 64], strides = [1, 1, 1, 1]} : vector<2x2x8x64xf32> to vector<1x2x8x64xf32>
    %50 = vector.shape_cast %49 : vector<1x2x8x64xf32> to vector<2x8x64xf32>
    %51 = tpu.concatenate %48, %50 in 2 : vector<2x8x64xf32>, vector<2x8x64xf32> -> vector<2x8x128xf32>
    %52 = vector.shape_cast %51 : vector<2x8x128xf32> to vector<16x128xf32>
    %c0_15 = arith.constant 0 : index
    %c0_16 = arith.constant 0 : index
    %c0_17 = arith.constant 0 : index
    %53 = vector.load %arg7[%c0_15, %c0_16, %c0_17] : memref<1x128x128xbf16, #tpu.memory_space<vmem>>, vector<1x128x128xbf16>
    %54 = vector.shape_cast %53 : vector<1x128x128xbf16> to vector<128x128xbf16>
    %55 = arith.truncf %52 : vector<16x128xf32> to vector<16x128xbf16>
    %cst_18 = arith.constant dense<0.000000e+00> : vector<16x128xf32>
    %56 = tpu.matmul %55, %54, %cst_18 {dimension_numbers = #tpu.dot_dimension_numbers<[1], [0], [0], [1], [0, 0, 1, 1], [], []>} : vector<16x128xbf16>, vector<128x128xbf16>, vector<16x128xf32> -> vector<16x128xf32>
    %c0_19 = arith.constant 0 : index
    %c0_20 = arith.constant 0 : index
    %c0_21 = arith.constant 0 : index
    %57 = vector.load %arg8[%c0_19, %c0_20, %c0_21] : memref<1x1x128xf32, #tpu.memory_space<vmem>>, vector<1x1x128xf32>
    %58 = vector.shape_cast %57 : vector<1x1x128xf32> to vector<1x128xf32>
    %59 = vector.broadcast %58 : vector<1x128xf32> to vector<16x128xf32>
    %60 = arith.addf %56, %59 : vector<16x128xf32>
    %61 = arith.addf %60, %3 : vector<16x128xf32>
    %c0_22 = arith.constant 0 : index
    %c0_23 = arith.constant 0 : index
    %c0_24 = arith.constant 0 : index
    %62 = vector.load %arg9[%c0_22, %c0_23, %c0_24] : memref<1x1x128xf32, #tpu.memory_space<vmem>>, vector<1x1x128xf32>
    %63 = vector.shape_cast %62 : vector<1x1x128xf32> to vector<1x128xf32>
    %c0_25 = arith.constant 0 : index
    %c0_26 = arith.constant 0 : index
    %c0_27 = arith.constant 0 : index
    %64 = vector.load %arg10[%c0_25, %c0_26, %c0_27] : memref<1x1x128xf32, #tpu.memory_space<vmem>>, vector<1x1x128xf32>
    %65 = vector.shape_cast %64 : vector<1x1x128xf32> to vector<1x128xf32>
    %cst_28 = arith.constant dense<0.000000e+00> : vector<16xf32>
    %66 = vector.multi_reduction <add>, %61, %cst_28 [1] : vector<16x128xf32> to vector<16xf32>
    %67 = vector.shape_cast %66 : vector<16xf32> to vector<16x1xf32>
    %cst_29 = arith.constant 1.280000e+02 : f32
    %68 = vector.broadcast %cst_29 : f32 to vector<16x1xf32>
    %69 = arith.divf %67, %68 : vector<16x1xf32>
    %70 = vector.broadcast %69 : vector<16x1xf32> to vector<16x128xf32>
    %71 = arith.subf %61, %70 : vector<16x128xf32>
    %72 = arith.mulf %71, %71 : vector<16x128xf32>
    %cst_30 = arith.constant dense<0.000000e+00> : vector<16xf32>
    %73 = vector.multi_reduction <add>, %72, %cst_30 [1] : vector<16x128xf32> to vector<16xf32>
    %74 = vector.shape_cast %73 : vector<16xf32> to vector<16x1xf32>
    %cst_31 = arith.constant 1.280000e+02 : f32
    %75 = vector.broadcast %cst_31 : f32 to vector<16x1xf32>
    %76 = arith.divf %74, %75 : vector<16x1xf32>
    %77 = vector.broadcast %69 : vector<16x1xf32> to vector<16x128xf32>
    %78 = arith.subf %61, %77 : vector<16x128xf32>
    %cst_32 = arith.constant 9.99999996E-13 : f32
    %79 = vector.broadcast %cst_32 : f32 to vector<16x1xf32>
    %80 = arith.addf %76, %79 : vector<16x1xf32>
    %81 = math.rsqrt %80 : vector<16x1xf32>
    %82 = vector.broadcast %81 : vector<16x1xf32> to vector<16x128xf32>
    %83 = arith.mulf %78, %82 : vector<16x128xf32>
    %84 = vector.broadcast %63 : vector<1x128xf32> to vector<16x128xf32>
    %85 = arith.mulf %83, %84 : vector<16x128xf32>
    %86 = vector.broadcast %65 : vector<1x128xf32> to vector<16x128xf32>
    %87 = arith.addf %85, %86 : vector<16x128xf32>
    %c0_33 = arith.constant 0 : index
    %c0_34 = arith.constant 0 : index
    %c0_35 = arith.constant 0 : index
    %88 = vector.load %arg11[%c0_33, %c0_34, %c0_35] : memref<1x128x512xbf16, #tpu.memory_space<vmem>>, vector<1x128x512xbf16>
    %89 = vector.shape_cast %88 : vector<1x128x512xbf16> to vector<128x512xbf16>
    %90 = arith.truncf %87 : vector<16x128xf32> to vector<16x128xbf16>
    %cst_36 = arith.constant dense<0.000000e+00> : vector<16x512xf32>
    %91 = tpu.matmul %90, %89, %cst_36 {dimension_numbers = #tpu.dot_dimension_numbers<[1], [0], [0], [1], [0, 0, 1, 1], [], []>} : vector<16x128xbf16>, vector<128x512xbf16>, vector<16x512xf32> -> vector<16x512xf32>
    %c0_37 = arith.constant 0 : index
    %c0_38 = arith.constant 0 : index
    %c0_39 = arith.constant 0 : index
    %92 = vector.load %arg12[%c0_37, %c0_38, %c0_39] : memref<1x1x512xf32, #tpu.memory_space<vmem>>, vector<1x1x512xf32>
    %93 = vector.shape_cast %92 : vector<1x1x512xf32> to vector<1x512xf32>
    %94 = vector.broadcast %93 : vector<1x512xf32> to vector<16x512xf32>
    %95 = arith.addf %91, %94 : vector<16x512xf32>
    %96 = arith.mulf %95, %95 : vector<16x512xf32>
    %97 = arith.mulf %95, %96 : vector<16x512xf32>
    %cst_40 = arith.constant 4.471500e-02 : f32
    %98 = vector.broadcast %cst_40 : f32 to vector<16x512xf32>
    %99 = arith.mulf %98, %97 : vector<16x512xf32>
    %100 = arith.addf %95, %99 : vector<16x512xf32>
    %cst_41 = arith.constant 0.797884583 : f32
    %101 = vector.broadcast %cst_41 : f32 to vector<16x512xf32>
    %102 = arith.mulf %101, %100 : vector<16x512xf32>
    %103 = math.tanh %102 : vector<16x512xf32>
    %cst_42 = arith.constant 1.000000e+00 : f32
    %104 = vector.broadcast %cst_42 : f32 to vector<16x512xf32>
    %105 = arith.addf %104, %103 : vector<16x512xf32>
    %cst_43 = arith.constant 5.000000e-01 : f32
    %106 = vector.broadcast %cst_43 : f32 to vector<16x512xf32>
    %107 = arith.mulf %106, %105 : vector<16x512xf32>
    %108 = arith.mulf %95, %107 : vector<16x512xf32>
    %c0_44 = arith.constant 0 : index
    %c0_45 = arith.constant 0 : index
    %c0_46 = arith.constant 0 : index
    %109 = vector.load %arg13[%c0_44, %c0_45, %c0_46] : memref<1x512x128xbf16, #tpu.memory_space<vmem>>, vector<1x512x128xbf16>
    %110 = vector.shape_cast %109 : vector<1x512x128xbf16> to vector<512x128xbf16>
    %111 = arith.truncf %108 : vector<16x512xf32> to vector<16x512xbf16>
    %cst_47 = arith.constant dense<0.000000e+00> : vector<16x128xf32>
    %112 = tpu.matmul %111, %110, %cst_47 {dimension_numbers = #tpu.dot_dimension_numbers<[1], [0], [0], [1], [0, 0, 1, 1], [], []>} : vector<16x512xbf16>, vector<512x128xbf16>, vector<16x128xf32> -> vector<16x128xf32>
    %c0_48 = arith.constant 0 : index
    %c0_49 = arith.constant 0 : index
    %c0_50 = arith.constant 0 : index
    %113 = vector.load %arg14[%c0_48, %c0_49, %c0_50] : memref<1x1x128xf32, #tpu.memory_space<vmem>>, vector<1x1x128xf32>
    %114 = vector.shape_cast %113 : vector<1x1x128xf32> to vector<1x128xf32>
    %115 = vector.broadcast %114 : vector<1x128xf32> to vector<16x128xf32>
    %116 = arith.addf %112, %115 : vector<16x128xf32>
    %117 = arith.addf %116, %87 : vector<16x128xf32>
    %c0_51 = arith.constant 0 : index
    %c0_52 = arith.constant 0 : index
    %c0_53 = arith.constant 0 : index
    %118 = vector.load %arg15[%c0_51, %c0_52, %c0_53] : memref<1x1x128xf32, #tpu.memory_space<vmem>>, vector<1x1x128xf32>
    %119 = vector.shape_cast %118 : vector<1x1x128xf32> to vector<1x128xf32>
    %c0_54 = arith.constant 0 : index
    %c0_55 = arith.constant 0 : index
    %c0_56 = arith.constant 0 : index
    %120 = vector.load %arg16[%c0_54, %c0_55, %c0_56] : memref<1x1x128xf32, #tpu.memory_space<vmem>>, vector<1x1x128xf32>
    %121 = vector.shape_cast %120 : vector<1x1x128xf32> to vector<1x128xf32>
    %cst_57 = arith.constant dense<0.000000e+00> : vector<16xf32>
    %122 = vector.multi_reduction <add>, %117, %cst_57 [1] : vector<16x128xf32> to vector<16xf32>
    %123 = vector.shape_cast %122 : vector<16xf32> to vector<16x1xf32>
    %cst_58 = arith.constant 1.280000e+02 : f32
    %124 = vector.broadcast %cst_58 : f32 to vector<16x1xf32>
    %125 = arith.divf %123, %124 : vector<16x1xf32>
    %126 = vector.broadcast %125 : vector<16x1xf32> to vector<16x128xf32>
    %127 = arith.subf %117, %126 : vector<16x128xf32>
    %128 = arith.mulf %127, %127 : vector<16x128xf32>
    %cst_59 = arith.constant dense<0.000000e+00> : vector<16xf32>
    %129 = vector.multi_reduction <add>, %128, %cst_59 [1] : vector<16x128xf32> to vector<16xf32>
    %130 = vector.shape_cast %129 : vector<16xf32> to vector<16x1xf32>
    %cst_60 = arith.constant 1.280000e+02 : f32
    %131 = vector.broadcast %cst_60 : f32 to vector<16x1xf32>
    %132 = arith.divf %130, %131 : vector<16x1xf32>
    %133 = vector.broadcast %125 : vector<16x1xf32> to vector<16x128xf32>
    %134 = arith.subf %117, %133 : vector<16x128xf32>
    %cst_61 = arith.constant 9.99999996E-13 : f32
    %135 = vector.broadcast %cst_61 : f32 to vector<16x1xf32>
    %136 = arith.addf %132, %135 : vector<16x1xf32>
    %137 = math.rsqrt %136 : vector<16x1xf32>
    %138 = vector.broadcast %137 : vector<16x1xf32> to vector<16x128xf32>
    %139 = arith.mulf %134, %138 : vector<16x128xf32>
    %140 = vector.broadcast %119 : vector<1x128xf32> to vector<16x128xf32>
    %141 = arith.mulf %139, %140 : vector<16x128xf32>
    %142 = vector.broadcast %121 : vector<1x128xf32> to vector<16x128xf32>
    %143 = arith.addf %141, %142 : vector<16x128xf32>
    %c0_62 = arith.constant 0 : index
    %c0_63 = arith.constant 0 : index
    %144 = vector.load %arg24[%c0_62, %c0_63] : memref<16x128xf32, #tpu.memory_space<vmem>>, vector<16x128xf32>
    tpu.vector_store %arg24[%c0_62, %c0_63], %143 {strides = array<i32>} : memref<16x128xf32, #tpu.memory_space<vmem>>, vector<16x128xf32>,
    %c1_i32 = arith.constant 1 : i32
    %145 = arith.cmpi eq, %arg0, %c1_i32 : i32
    %146 = arith.extui %145 : i1 to i32
    %c0_i32_64 = arith.constant 0 : i32
    %147 = arith.cmpi ne, %146, %c0_i32_64 : i32
    scf.if %147 {
      %c0_65 = arith.constant 0 : index
      %c0_66 = arith.constant 0 : index
      %148 = vector.load %arg21[%c0_65, %c0_66] : memref<16x128xf32, #tpu.memory_space<vmem>>, vector<16x128xf32>
      tpu.vector_store %arg21[%c0_65, %c0_66], %143 {strides = array<i32>} : memref<16x128xf32, #tpu.memory_space<vmem>>, vector<16x128xf32>,
      %149 = vector.shape_cast %143 : vector<16x128xf32> to vector<2x8x128xf32>
      %150 = vector.extract_strided_slice %149 {offsets = [0, 0, 0], sizes = [2, 1, 128], strides = [1, 1, 1]} : vector<2x8x128xf32> to vector<2x1x128xf32>
      %151 = vector.shape_cast %150 : vector<2x1x128xf32> to vector<2x128xf32>
      %c0_67 = arith.constant 0 : index
      %c0_68 = arith.constant 0 : index
      %152 = vector.load %arg17[%c0_67, %c0_68] : memref<128x128xbf16, #tpu.memory_space<vmem>>, vector<128x128xbf16>
      %153 = arith.truncf %151 : vector<2x128xf32> to vector<2x128xbf16>
      %cst_69 = arith.constant dense<0.000000e+00> : vector<2x128xf32>
      %154 = tpu.matmul %153, %152, %cst_69 {dimension_numbers = #tpu.dot_dimension_numbers<[1], [0], [0], [1], [0, 0, 1, 1], [], []>} : vector<2x128xbf16>, vector<128x128xbf16>, vector<2x128xf32> -> vector<2x128xf32>
      %c0_70 = arith.constant 0 : index
      %c0_71 = arith.constant 0 : index
      %155 = vector.load %arg18[%c0_70, %c0_71] : memref<1x128xf32, #tpu.memory_space<vmem>>, vector<1x128xf32>
      %156 = vector.broadcast %155 : vector<1x128xf32> to vector<2x128xf32>
      %157 = arith.addf %154, %156 : vector<2x128xf32>
      %158 = math.tanh %157 : vector<2x128xf32>
      %c0_72 = arith.constant 0 : index
      %c0_73 = arith.constant 0 : index
      %159 = vector.load %arg22[%c0_72, %c0_73] : memref<2x128xf32, #tpu.memory_space<vmem>>, vector<2x128xf32>
      tpu.vector_store %arg22[%c0_72, %c0_73], %158 {strides = array<i32>} : memref<2x128xf32, #tpu.memory_space<vmem>>, vector<2x128xf32>,
      %c0_74 = arith.constant 0 : index
      %c0_75 = arith.constant 0 : index
      %160 = vector.load %arg19[%c0_74, %c0_75] : memref<128x128xbf16, #tpu.memory_space<vmem>>, vector<128x128xbf16>
      %161 = arith.truncf %158 : vector<2x128xf32> to vector<2x128xbf16>
      %cst_76 = arith.constant dense<0.000000e+00> : vector<2x128xf32>
      %162 = tpu.matmul %161, %160, %cst_76 {dimension_numbers = #tpu.dot_dimension_numbers<[1], [0], [0], [1], [0, 0, 1, 1], [], []>} : vector<2x128xbf16>, vector<128x128xbf16>, vector<2x128xf32> -> vector<2x128xf32>
      %c0_77 = arith.constant 0 : index
      %c0_78 = arith.constant 0 : index
      %163 = vector.load %arg20[%c0_77, %c0_78] : memref<1x128xf32, #tpu.memory_space<vmem>>, vector<1x128xf32>
      %164 = vector.broadcast %163 : vector<1x128xf32> to vector<2x128xf32>
      %165 = arith.addf %162, %164 : vector<2x128xf32>
      %c0_79 = arith.constant 0 : index
      %c0_80 = arith.constant 0 : index
      %166 = vector.load %arg23[%c0_79, %c0_80] : memref<2x128xf32, #tpu.memory_space<vmem>>, vector<2x128xf32>
      tpu.vector_store %arg23[%c0_79, %c0_80], %165 {strides = array<i32>} : memref<2x128xf32, #tpu.memory_space<vmem>>, vector<2x128xf32>,
    } else {
    }
    return
  }
  func.func @transform_0(%arg0: i32) -> (i32, i32) {
    %c0_i32 = arith.constant 0 : i32
    %c0_i32_0 = arith.constant 0 : i32
    %c0_i32_1 = arith.constant 0 : i32
    return %c0_i32, %c0_i32_0 : i32, i32
  }
  func.func @transform_1(%arg0: i32) -> (i32, i32, i32) {
    %c0_i32 = arith.constant 0 : i32
    %c0_i32_0 = arith.constant 0 : i32
    %c0_i32_1 = arith.constant 0 : i32
    %c0_i32_2 = arith.constant 0 : i32
    return %c0_i32, %c0_i32_0, %c0_i32_1 : i32, i32, i32
  }
  func.func @transform_2(%arg0: i32) -> (i32, i32) {
    %c0_i32 = arith.constant 0 : i32
    %c0_i32_0 = arith.constant 0 : i32
    %c0_i32_1 = arith.constant 0 : i32
    return %c0_i32, %c0_i32_0 : i32, i32
  }
  func.func @transform_3(%arg0: i32) -> (i32, i32) {
    %c0_i32 = arith.constant 0 : i32
    %c0_i32_0 = arith.constant 0 : i32
    %c0_i32_1 = arith.constant 0 : i32
    return %c0_i32, %c0_i32_0 : i32, i32
  }
  func.func @transform_4(%arg0: i32) -> (i32, i32, i32) {
    %c0_i32 = arith.constant 0 : i32
    %c0_i32_0 = arith.constant 0 : i32
    %c0_i32_1 = arith.constant 0 : i32
    return %arg0, %c0_i32, %c0_i32_0 : i32, i32, i32
  }
  func.func @transform_5(%arg0: i32) -> (i32, i32, i32) {
    %c0_i32 = arith.constant 0 : i32
    %c0_i32_0 = arith.constant 0 : i32
    %c0_i32_1 = arith.constant 0 : i32
    return %arg0, %c0_i32, %c0_i32_0 : i32, i32, i32
  }
  func.func @transform_6(%arg0: i32) -> (i32, i32, i32) {
    %c0_i32 = arith.constant 0 : i32
    %c0_i32_0 = arith.constant 0 : i32
    %c0_i32_1 = arith.constant 0 : i32
    return %arg0, %c0_i32, %c0_i32_0 : i32, i32, i32
  }
  func.func @transform_7(%arg0: i32) -> (i32, i32, i32) {
    %c0_i32 = arith.constant 0 : i32
    %c0_i32_0 = arith.constant 0 : i32
    %c0_i32_1 = arith.constant 0 : i32
    return %arg0, %c0_i32, %c0_i32_0 : i32, i32, i32
  }
  func.func @transform_8(%arg0: i32) -> (i32, i32, i32) {
    %c0_i32 = arith.constant 0 : i32
    %c0_i32_0 = arith.constant 0 : i32
    %c0_i32_1 = arith.constant 0 : i32
    return %arg0, %c0_i32, %c0_i32_0 : i32, i32, i32
  }
  func.func @transform_9(%arg0: i32) -> (i32, i32, i32) {
    %c0_i32 = arith.constant 0 : i32
    %c0_i32_0 = arith.constant 0 : i32
    %c0_i32_1 = arith.constant 0 : i32
    return %arg0, %c0_i32, %c0_i32_0 : i32, i32, i32
  }
  func.func @transform_10(%arg0: i32) -> (i32, i32, i32) {
    %c0_i32 = arith.constant 0 : i32
    %c0_i32_0 = arith.constant 0 : i32
    %c0_i32_1 = arith.constant 0 : i32
    return %arg0, %c0_i32, %c0_i32_0 : i32, i32, i32
  }
  func.func @transform_11(%arg0: i32) -> (i32, i32, i32) {
    %c0_i32 = arith.constant 0 : i32
    %c0_i32_0 = arith.constant 0 : i32
    %c0_i32_1 = arith.constant 0 : i32
    return %arg0, %c0_i32, %c0_i32_0 : i32, i32, i32
  }
  func.func @transform_12(%arg0: i32) -> (i32, i32, i32) {
    %c0_i32 = arith.constant 0 : i32
    %c0_i32_0 = arith.constant 0 : i32
    %c0_i32_1 = arith.constant 0 : i32
    return %arg0, %c0_i32, %c0_i32_0 : i32, i32, i32
  }
  func.func @transform_13(%arg0: i32) -> (i32, i32, i32) {
    %c0_i32 = arith.constant 0 : i32
    %c0_i32_0 = arith.constant 0 : i32
    %c0_i32_1 = arith.constant 0 : i32
    return %arg0, %c0_i32, %c0_i32_0 : i32, i32, i32
  }
  func.func @transform_14(%arg0: i32) -> (i32, i32, i32) {
    %c0_i32 = arith.constant 0 : i32
    %c0_i32_0 = arith.constant 0 : i32
    %c0_i32_1 = arith.constant 0 : i32
    return %arg0, %c0_i32, %c0_i32_0 : i32, i32, i32
  }
  func.func @transform_15(%arg0: i32) -> (i32, i32, i32) {
    %c0_i32 = arith.constant 0 : i32
    %c0_i32_0 = arith.constant 0 : i32
    %c0_i32_1 = arith.constant 0 : i32
    return %arg0, %c0_i32, %c0_i32_0 : i32, i32, i32
  }
  func.func @transform_16(%arg0: i32) -> (i32, i32) {
    %c0_i32 = arith.constant 0 : i32
    %c0_i32_0 = arith.constant 0 : i32
    %c0_i32_1 = arith.constant 0 : i32
    return %c0_i32, %c0_i32_0 : i32, i32
  }
  func.func @transform_17(%arg0: i32) -> (i32, i32) {
    %c0_i32 = arith.constant 0 : i32
    %c0_i32_0 = arith.constant 0 : i32
    %c0_i32_1 = arith.constant 0 : i32
    return %c0_i32, %c0_i32_0 : i32, i32
  }
  func.func @transform_18(%arg0: i32) -> (i32, i32) {
    %c0_i32 = arith.constant 0 : i32
    %c0_i32_0 = arith.constant 0 : i32
    %c0_i32_1 = arith.constant 0 : i32
    return %c0_i32, %c0_i32_0 : i32, i32
  }
  func.func @transform_19(%arg0: i32) -> (i32, i32) {
    %c0_i32 = arith.constant 0 : i32
    %c0_i32_0 = arith.constant 0 : i32
    %c0_i32_1 = arith.constant 0 : i32
    return %c0_i32, %c0_i32_0 : i32, i32
  }
  func.func @transform_20(%arg0: i32) -> (i32, i32) {
    %c0_i32 = arith.constant 0 : i32
    %c0_i32_0 = arith.constant 0 : i32
    %c0_i32_1 = arith.constant 0 : i32
    return %c0_i32, %c0_i32_0 : i32, i32
  }
  func.func @transform_21(%arg0: i32) -> (i32, i32) {
    %c0_i32 = arith.constant 0 : i32
    %c0_i32_0 = arith.constant 0 : i32
    %c0_i32_1 = arith.constant 0 : i32
    return %c0_i32, %c0_i32_0 : i32, i32
  }
  func.func @transform_22(%arg0: i32) -> (i32, i32) {
    %c0_i32 = arith.constant 0 : i32
    %c0_i32_0 = arith.constant 0 : i32
    %c0_i32_1 = arith.constant 0 : i32
    return %c0_i32, %c0_i32_0 : i32, i32
  }
}

</mosaic_0001>

<llo_original>
// kernel: bert_classficator_forward.1
$region0: #{bert_classficator_forward.1}
  #allocation0 [shape = 'u32[]', space=smem, size = 0x4, offset = 0x4, fixed_abs, tag = 'smem constant byte address 0x4 - core index']
  #allocation1 [shape = 'u32[72,128]{1,0:T(1,128)}', space=vmem, size = 0x9000, scoped, tag = 'internal scratch']
  #allocation2 [shape = 'f32[16,128]{1,0:T(8,128)}', space=vmem, size = 0x2000, scoped, tag = 'scratch operand']
  %s0 = inlined_call_operand.vmem [shape: f32[16,128], index: 0, kind: input, shape index: {}]
  %s1 = inlined_call_operand.vmem [shape: f32[4,1,8], index: 1, kind: input, shape index: {}]
  %s2 = inlined_call_operand.vmem [shape: f32[1,128], index: 2, kind: input, shape index: {}]
  %s3 = inlined_call_operand.vmem [shape: f32[1,128], index: 3, kind: input, shape index: {}, may-alias: {3,17,19}]
  %s4 = inlined_call_operand.hbm [shape: bf16[2,128,384], index: 4, kind: input, shape index: {}]
  %s5 = inlined_call_operand.vmem [shape: f32[2,1,384], index: 5, kind: input, shape index: {}]
  %s6 = inlined_call_operand.vmem [shape: bf16[2,128,128], index: 6, kind: input, shape index: {}]
  %s7 = inlined_call_operand.vmem [shape: f32[2,1,128], index: 7, kind: input, shape index: {}, may-alias: {7,9,13,15}]
  %s8 = inlined_call_operand.vmem [shape: f32[2,1,128], index: 8, kind: input, shape index: {}, may-alias: {8,14}]
  %s9 = inlined_call_operand.vmem [shape: f32[2,1,128], index: 9, kind: input, shape index: {}, may-alias: {7,9,13,15}]
  %s10 = inlined_call_operand.hbm [shape: bf16[2,128,512], index: 10, kind: input, shape index: {}]
  %s11 = inlined_call_operand.vmem [shape: f32[2,1,512], index: 11, kind: input, shape index: {}]
  %s12 = inlined_call_operand.hbm [shape: bf16[2,512,128], index: 12, kind: input, shape index: {}]
  %s13 = inlined_call_operand.vmem [shape: f32[2,1,128], index: 13, kind: input, shape index: {}, may-alias: {7,9,13,15}]
  %s14 = inlined_call_operand.vmem [shape: f32[2,1,128], index: 14, kind: input, shape index: {}, may-alias: {8,14}]
  %s15 = inlined_call_operand.vmem [shape: f32[2,1,128], index: 15, kind: input, shape index: {}, may-alias: {7,9,13,15}]
  %s16 = inlined_call_operand.vmem [shape: bf16[128,128], index: 16, kind: input, shape index: {}]
  %s17 = inlined_call_operand.vmem [shape: f32[1,128], index: 17, kind: input, shape index: {}, may-alias: {3,17,19}]
  %s18 = inlined_call_operand.vmem [shape: bf16[128,128], index: 18, kind: input, shape index: {}]
  %s19 = inlined_call_operand.vmem [shape: f32[1,128], index: 19, kind: input, shape index: {}, may-alias: {3,17,19}]
  %s20 = inlined_call_operand.hbm [shape: f32[16,128], index: 20, kind: output, shape index: {0}]
  %s21 = inlined_call_operand.hbm [shape: f32[2,128], index: 21, kind: output, shape index: {1}]
  %s22 = inlined_call_operand.hbm [shape: f32[2,128], index: 22, kind: output, shape index: {2}]
  %23 = xla_tuple %s20, %s21, %s22
  %s24 = sld [smem:[#allocation0]]
  $region149: #{bert_classficator_forward.1} parent=0
    _
  %s26 = ssub.s32 1, %s24
  %s27 = scalar_select 0, %s26, %s24
  $region1: #{bert_classficator_forward.1} parent=0
    #allocation3 [shape = 'u8[196608]{0}', space=vmem, size = 0x30000, scoped, tag = 'input window, operand 4']
    #allocation4 [shape = 's32[2]{0}', space=sflag, size = 0x8, scoped, tag = 'scoped memory for bert_classficator_forward.1']
    #allocation5 [shape = 's32[2]{0}', space=sflag, size = 0x8, scoped, tag = 'scoped memory for bert_classficator_forward.1']
    #allocation6 [shape = 'u8[262144]{0}', space=vmem, size = 0x40000, scoped, tag = 'input window, operand 10']
    #allocation7 [shape = 's32[2]{0}', space=sflag, size = 0x8, scoped, tag = 'scoped memory for bert_classficator_forward.1']
    #allocation8 [shape = 'u8[262144]{0}', space=vmem, size = 0x40000, scoped, tag = 'input window, operand 12']
    #allocation9 [shape = 'u8[8192]{0}', space=vmem, size = 0x2000, scoped, tag = 'output window, operand 0, single buffered']
    #allocation10 [shape = 'u8[1024]{0}', space=vmem, size = 0x400, scoped, tag = 'output window, operand 1, single buffered']
    #allocation11 [shape = 's32[1]{0}', space=sflag, size = 0x4, scoped, tag = 'scoped memory for bert_classficator_forward.1']
    #allocation12 [shape = 'u8[1024]{0}', space=vmem, size = 0x400, scoped, tag = 'output window, operand 2, single buffered']
    %28 = vsyncpa [#allocation4], 0
    %s29 = scalar_lea.sflag [#allocation4], 1
    %30 = vsyncpa %s29, 0
    %31 = vsyncpa [#allocation7], 0
    %s32 = scalar_lea.sflag [#allocation7], 1
    %33 = vsyncpa %s32, 0
    %34 = vsyncpa [#allocation5], 0
    %35 = vsyncpa [#allocation11], 0
    loop: start=0, step=1, limit=4
    $region2: #{bert_classficator_forward.1} parent=1 // loop_pre_header
      _
    $region3: #{bert_classficator_forward.1} parent=1 // loop_header
      %s37 = sphi 0, %s41
      %p38 = scmp.ge.s32.totalorder %s37, 4
      %s45 = sphi 0, %s45
      %s47 = sphi 0, %s45
      %s48 = sphi 0, %s47
      %s62 = sphi 0, %s48
      %s66 = sphi 0, %s66
      %s68 = sphi 0, %s66
      %s69 = sphi 0, %s68
      %s83 = sphi 0, %s69
      %s87 = sphi 0, %s87
      %s89 = sphi 0, %s87
      %s90 = sphi 0, %s89
      %s104 = sphi 0, %s90
      %s108 = sphi 0, %s108
      %s110 = sphi 0, %s108
      %s111 = sphi 0, %s110
      %s125 = sphi 0, %s111
      %s131 = sphi 0, %s133
      %s134 = sphi 0, %s131
      %s135 = sphi 0, %s134
      %s151 = sphi 0, %s135
      %s157 = sphi 0, %s159
      %s160 = sphi 0, %s157
      %s161 = sphi 0, %s160
      %s177 = sphi 0, %s161
      %s183 = sphi 0, %s185
      %s186 = sphi 0, %s183
      %s187 = sphi 0, %s186
      %s203 = sphi 0, %s187
      %s209 = sphi 0, %s211
      %s212 = sphi 0, %s209
      %s213 = sphi 0, %s212
      %s229 = sphi 0, %s213
      %s235 = sphi 0, %s237
      %s238 = sphi 0, %s235
      %s239 = sphi 0, %s238
      %s255 = sphi 0, %s239
      %s261 = sphi 0, %s263
      %s264 = sphi 0, %s261
      %s265 = sphi 0, %s264
      %s281 = sphi 0, %s265
      %s287 = sphi 0, %s289
      %s290 = sphi 0, %s287
      %s291 = sphi 0, %s290
      %s307 = sphi 0, %s291
      %s313 = sphi 0, %s315
      %s316 = sphi 0, %s313
      %s317 = sphi 0, %s316
      %s333 = sphi 0, %s317
      %s339 = sphi 0, %s341
      %s342 = sphi 0, %s339
      %s343 = sphi 0, %s342
      %s359 = sphi 0, %s343
      %s365 = sphi 0, %s367
      %s368 = sphi 0, %s365
      %s369 = sphi 0, %s368
      %s385 = sphi 0, %s369
      %s391 = sphi 0, %s393
      %s394 = sphi 0, %s391
      %s395 = sphi 0, %s394
      %s411 = sphi 0, %s395
      %s417 = sphi 0, %s419
      %s420 = sphi 0, %s417
      %s421 = sphi 0, %s420
      %s437 = sphi 0, %s421
      %s441 = sphi 0, %s441
      %s443 = sphi 0, %s441
      %s444 = sphi 0, %s443
      %s458 = sphi 0, %s444
      %s462 = sphi 0, %s462
      %s464 = sphi 0, %s462
      %s465 = sphi 0, %s464
      %s479 = sphi 0, %s465
      %s483 = sphi 0, %s483
      %s485 = sphi 0, %s483
      %s486 = sphi 0, %s485
      %s500 = sphi 0, %s486
      %s504 = sphi 0, %s504
      %s506 = sphi 0, %s504
      %s507 = sphi 0, %s506
      %s521 = sphi 0, %s507
      %s525 = sphi 0, %s525
      %s527 = sphi 0, %s525
      %s528 = sphi 0, %s527
      %s542 = sphi 0, %s528
      %s546 = sphi 0, %s546
      %s548 = sphi 0, %s546
      %s549 = sphi 0, %s548
      %s563 = sphi 0, %s549
      %s567 = sphi 0, %s567
      %s569 = sphi 0, %s567
      %s570 = sphi 0, %s569
      %s584 = sphi 0, %s570
    $region4: #{bert_classficator_forward.1} parent=1 // loop_header_branch
      %40 = sbr.rel (%p38) target = $region8
    $region5: #{bert_classficator_forward.1} parent=1 // loop_body
      %s42 = ssub.s32 %s37, 1
      %s43 = ssub.s32 %s37, 2
      %s44 = sadd.s32 %s37, 1
      %s46 = sadd.s32 %s45, 1
      %p49 = scmp.eq.s32.totalorder %s37, 1
      %p50 = scmp.ne.s32.totalorder %s45, %s47
      %p51 = scmp.eq.s32.totalorder %s37, 0
      %p52 = por %p50, %p51
      %p53 = scmp.ne.s32.totalorder %s45, %s47
      %p54 = scmp.eq.s32.totalorder %s42, 1
      %p55 = por %p53, %p54
      %p56 = scmp.ne.s32.totalorder %s47, %s48
      %p57 = scmp.eq.s32.totalorder %s42, 0
      %p58 = por %p56, %p57
      %p59 = scmp.ne.s32.totalorder %s47, %s48
      %p60 = scmp.eq.s32.totalorder %s43, 1
      %p61 = por %p59, %p60
      %p63 = scmp.ne.s32.totalorder %s48, %s62
      %p64 = scmp.eq.s32.totalorder %s43, 0
      %p65 = por %p63, %p64
      %s67 = sadd.s32 %s66, 1
      %p70 = scmp.eq.s32.totalorder %s37, 1
      %p71 = scmp.ne.s32.totalorder %s66, %s68
      %p72 = scmp.eq.s32.totalorder %s37, 0
      %p73 = por %p71, %p72
      %p74 = scmp.ne.s32.totalorder %s66, %s68
      %p75 = scmp.eq.s32.totalorder %s42, 1
      %p76 = por %p74, %p75
      %p77 = scmp.ne.s32.totalorder %s68, %s69
      %p78 = scmp.eq.s32.totalorder %s42, 0
      %p79 = por %p77, %p78
      %p80 = scmp.ne.s32.totalorder %s68, %s69
      %p81 = scmp.eq.s32.totalorder %s43, 1
      %p82 = por %p80, %p81
      %p84 = scmp.ne.s32.totalorder %s69, %s83
      %p85 = scmp.eq.s32.totalorder %s43, 0
      %p86 = por %p84, %p85
      %s88 = sadd.s32 %s87, 1
      %p91 = scmp.eq.s32.totalorder %s37, 1
      %p92 = scmp.ne.s32.totalorder %s87, %s89
      %p93 = scmp.eq.s32.totalorder %s37, 0
      %p94 = por %p92, %p93
      %p95 = scmp.ne.s32.totalorder %s87, %s89
      %p96 = scmp.eq.s32.totalorder %s42, 1
      %p97 = por %p95, %p96
      %p98 = scmp.ne.s32.totalorder %s89, %s90
      %p99 = scmp.eq.s32.totalorder %s42, 0
      %p100 = por %p98, %p99
      %p101 = scmp.ne.s32.totalorder %s89, %s90
      %p102 = scmp.eq.s32.totalorder %s43, 1
      %p103 = por %p101, %p102
      %p105 = scmp.ne.s32.totalorder %s90, %s104
      %p106 = scmp.eq.s32.totalorder %s43, 0
      %p107 = por %p105, %p106
      %s109 = sadd.s32 %s108, 1
      %p112 = scmp.eq.s32.totalorder %s37, 1
      %p113 = scmp.ne.s32.totalorder %s108, %s110
      %p114 = scmp.eq.s32.totalorder %s37, 0
      %p115 = por %p113, %p114
      %p116 = scmp.ne.s32.totalorder %s108, %s110
      %p117 = scmp.eq.s32.totalorder %s42, 1
      %p118 = por %p116, %p117
      %p119 = scmp.ne.s32.totalorder %s110, %s111
      %p120 = scmp.eq.s32.totalorder %s42, 0
      %p121 = por %p119, %p120
      %p122 = scmp.ne.s32.totalorder %s110, %s111
      %p123 = scmp.eq.s32.totalorder %s43, 1
      %p124 = por %p122, %p123
      %p126 = scmp.ne.s32.totalorder %s111, %s125
      %p127 = scmp.eq.s32.totalorder %s43, 0
      %p128 = por %p126, %p127
      %s129 = ssub.s32 %s37, %s44
      %p130 = scmp.eq.s32.totalorder %s129, 0
      %s132 = sadd.s32 %s131, 1
      %s133 = scalar_select %p130, %s131, %s132
      %p136 = pneg %p130
      %p137 = scmp.eq.s32.totalorder %s37, 1
      %p138 = por %p136, %p137
      %p139 = scmp.ne.s32.totalorder %s131, %s134
      %p140 = scmp.eq.s32.totalorder %s37, 0
      %p141 = por %p139, %p140
      %p142 = scmp.ne.s32.totalorder %s131, %s134
      %p143 = scmp.eq.s32.totalorder %s42, 1
      %p144 = por %p142, %p143
      %p145 = scmp.ne.s32.totalorder %s134, %s135
      %p146 = scmp.eq.s32.totalorder %s42, 0
      %p147 = por %p145, %p146
      %p148 = scmp.ne.s32.totalorder %s134, %s135
      %p149 = scmp.eq.s32.totalorder %s43, 1
      %p150 = por %p148, %p149
      %p152 = scmp.ne.s32.totalorder %s135, %s151
      %p153 = scmp.eq.s32.totalorder %s43, 0
      %p154 = por %p152, %p153
      %s155 = ssub.s32 %s37, %s44
      %p156 = scmp.eq.s32.totalorder %s155, 0
      %s158 = sadd.s32 %s157, 1
      %s159 = scalar_select %p156, %s157, %s158
      %p162 = pneg %p156
      %p163 = scmp.eq.s32.totalorder %s37, 1
      %p164 = por %p162, %p163
      %p165 = scmp.ne.s32.totalorder %s157, %s160
      %p166 = scmp.eq.s32.totalorder %s37, 0
      %p167 = por %p165, %p166
      %p168 = scmp.ne.s32.totalorder %s157, %s160
      %p169 = scmp.eq.s32.totalorder %s42, 1
      %p170 = por %p168, %p169
      %p171 = scmp.ne.s32.totalorder %s160, %s161
      %p172 = scmp.eq.s32.totalorder %s42, 0
      %p173 = por %p171, %p172
      %p174 = scmp.ne.s32.totalorder %s160, %s161
      %p175 = scmp.eq.s32.totalorder %s43, 1
      %p176 = por %p174, %p175
      %p178 = scmp.ne.s32.totalorder %s161, %s177
      %p179 = scmp.eq.s32.totalorder %s43, 0
      %p180 = por %p178, %p179
      %s181 = ssub.s32 %s37, %s44
      %p182 = scmp.eq.s32.totalorder %s181, 0
      %s184 = sadd.s32 %s183, 1
      %s185 = scalar_select %p182, %s183, %s184
      %p188 = pneg %p182
      %p189 = scmp.eq.s32.totalorder %s37, 1
      %p190 = por %p188, %p189
      %p191 = scmp.ne.s32.totalorder %s183, %s186
      %p192 = scmp.eq.s32.totalorder %s37, 0
      %p193 = por %p191, %p192
      %p194 = scmp.ne.s32.totalorder %s183, %s186
      %p195 = scmp.eq.s32.totalorder %s42, 1
      %p196 = por %p194, %p195
      %p197 = scmp.ne.s32.totalorder %s186, %s187
      %p198 = scmp.eq.s32.totalorder %s42, 0
      %p199 = por %p197, %p198
      %p200 = scmp.ne.s32.totalorder %s186, %s187
      %p201 = scmp.eq.s32.totalorder %s43, 1
      %p202 = por %p200, %p201
      %p204 = scmp.ne.s32.totalorder %s187, %s203
      %p205 = scmp.eq.s32.totalorder %s43, 0
      %p206 = por %p204, %p205
      %s207 = ssub.s32 %s37, %s44
      %p208 = scmp.eq.s32.totalorder %s207, 0
      %s210 = sadd.s32 %s209, 1
      %s211 = scalar_select %p208, %s209, %s210
      %p214 = pneg %p208
      %p215 = scmp.eq.s32.totalorder %s37, 1
      %p216 = por %p214, %p215
      %p217 = scmp.ne.s32.totalorder %s209, %s212
      %p218 = scmp.eq.s32.totalorder %s37, 0
      %p219 = por %p217, %p218
      %p220 = scmp.ne.s32.totalorder %s209, %s212
      %p221 = scmp.eq.s32.totalorder %s42, 1
      %p222 = por %p220, %p221
      %p223 = scmp.ne.s32.totalorder %s212, %s213
      %p224 = scmp.eq.s32.totalorder %s42, 0
      %p225 = por %p223, %p224
      %p226 = scmp.ne.s32.totalorder %s212, %s213
      %p227 = scmp.eq.s32.totalorder %s43, 1
      %p228 = por %p226, %p227
      %p230 = scmp.ne.s32.totalorder %s213, %s229
      %p231 = scmp.eq.s32.totalorder %s43, 0
      %p232 = por %p230, %p231
      %s233 = ssub.s32 %s37, %s44
      %p234 = scmp.eq.s32.totalorder %s233, 0
      %s236 = sadd.s32 %s235, 1
      %s237 = scalar_select %p234, %s235, %s236
      %p240 = pneg %p234
      %p241 = scmp.eq.s32.totalorder %s37, 1
      %p242 = por %p240, %p241
      %p243 = scmp.ne.s32.totalorder %s235, %s238
      %p244 = scmp.eq.s32.totalorder %s37, 0
      %p245 = por %p243, %p244
      %p246 = scmp.ne.s32.totalorder %s235, %s238
      %p247 = scmp.eq.s32.totalorder %s42, 1
      %p248 = por %p246, %p247
      %p249 = scmp.ne.s32.totalorder %s238, %s239
      %p250 = scmp.eq.s32.totalorder %s42, 0
      %p251 = por %p249, %p250
      %p252 = scmp.ne.s32.totalorder %s238, %s239
      %p253 = scmp.eq.s32.totalorder %s43, 1
      %p254 = por %p252, %p253
      %p256 = scmp.ne.s32.totalorder %s239, %s255
      %p257 = scmp.eq.s32.totalorder %s43, 0
      %p258 = por %p256, %p257
      %s259 = ssub.s32 %s37, %s44
      %p260 = scmp.eq.s32.totalorder %s259, 0
      %s262 = sadd.s32 %s261, 1
      %s263 = scalar_select %p260, %s261, %s262
      %p266 = pneg %p260
      %p267 = scmp.eq.s32.totalorder %s37, 1
      %p268 = por %p266, %p267
      %p269 = scmp.ne.s32.totalorder %s261, %s264
      %p270 = scmp.eq.s32.totalorder %s37, 0
      %p271 = por %p269, %p270
      %p272 = scmp.ne.s32.totalorder %s261, %s264
      %p273 = scmp.eq.s32.totalorder %s42, 1
      %p274 = por %p272, %p273
      %p275 = scmp.ne.s32.totalorder %s264, %s265
      %p276 = scmp.eq.s32.totalorder %s42, 0
      %p277 = por %p275, %p276
      %p278 = scmp.ne.s32.totalorder %s264, %s265
      %p279 = scmp.eq.s32.totalorder %s43, 1
      %p280 = por %p278, %p279
      %p282 = scmp.ne.s32.totalorder %s265, %s281
      %p283 = scmp.eq.s32.totalorder %s43, 0
      %p284 = por %p282, %p283
      %s285 = ssub.s32 %s37, %s44
      %p286 = scmp.eq.s32.totalorder %s285, 0
      %s288 = sadd.s32 %s287, 1
      %s289 = scalar_select %p286, %s287, %s288
      %p292 = pneg %p286
      %p293 = scmp.eq.s32.totalorder %s37, 1
      %p294 = por %p292, %p293
      %p295 = scmp.ne.s32.totalorder %s287, %s290
      %p296 = scmp.eq.s32.totalorder %s37, 0
      %p297 = por %p295, %p296
      %p298 = scmp.ne.s32.totalorder %s287, %s290
      %p299 = scmp.eq.s32.totalorder %s42, 1
      %p300 = por %p298, %p299
      %p301 = scmp.ne.s32.totalorder %s290, %s291
      %p302 = scmp.eq.s32.totalorder %s42, 0
      %p303 = por %p301, %p302
      %p304 = scmp.ne.s32.totalorder %s290, %s291
      %p305 = scmp.eq.s32.totalorder %s43, 1
      %p306 = por %p304, %p305
      %p308 = scmp.ne.s32.totalorder %s291, %s307
      %p309 = scmp.eq.s32.totalorder %s43, 0
      %p310 = por %p308, %p309
      %s311 = ssub.s32 %s37, %s44
      %p312 = scmp.eq.s32.totalorder %s311, 0
      %s314 = sadd.s32 %s313, 1
      %s315 = scalar_select %p312, %s313, %s314
      %p318 = pneg %p312
      %p319 = scmp.eq.s32.totalorder %s37, 1
      %p320 = por %p318, %p319
      %p321 = scmp.ne.s32.totalorder %s313, %s316
      %p322 = scmp.eq.s32.totalorder %s37, 0
      %p323 = por %p321, %p322
      %p324 = scmp.ne.s32.totalorder %s313, %s316
      %p325 = scmp.eq.s32.totalorder %s42, 1
      %p326 = por %p324, %p325
      %p327 = scmp.ne.s32.totalorder %s316, %s317
      %p328 = scmp.eq.s32.totalorder %s42, 0
      %p329 = por %p327, %p328
      %p330 = scmp.ne.s32.totalorder %s316, %s317
      %p331 = scmp.eq.s32.totalorder %s43, 1
      %p332 = por %p330, %p331
      %p334 = scmp.ne.s32.totalorder %s317, %s333
      %p335 = scmp.eq.s32.totalorder %s43, 0
      %p336 = por %p334, %p335
      %s337 = ssub.s32 %s37, %s44
      %p338 = scmp.eq.s32.totalorder %s337, 0
      %s340 = sadd.s32 %s339, 1
      %s341 = scalar_select %p338, %s339, %s340
      %p344 = pneg %p338
      %p345 = scmp.eq.s32.totalorder %s37, 1
      %p346 = por %p344, %p345
      %p347 = scmp.ne.s32.totalorder %s339, %s342
      %p348 = scmp.eq.s32.totalorder %s37, 0
      %p349 = por %p347, %p348
      %p350 = scmp.ne.s32.totalorder %s339, %s342
      %p351 = scmp.eq.s32.totalorder %s42, 1
      %p352 = por %p350, %p351
      %p353 = scmp.ne.s32.totalorder %s342, %s343
      %p354 = scmp.eq.s32.totalorder %s42, 0
      %p355 = por %p353, %p354
      %p356 = scmp.ne.s32.totalorder %s342, %s343
      %p357 = scmp.eq.s32.totalorder %s43, 1
      %p358 = por %p356, %p357
      %p360 = scmp.ne.s32.totalorder %s343, %s359
      %p361 = scmp.eq.s32.totalorder %s43, 0
      %p362 = por %p360, %p361
      %s363 = ssub.s32 %s37, %s44
      %p364 = scmp.eq.s32.totalorder %s363, 0
      %s366 = sadd.s32 %s365, 1
      %s367 = scalar_select %p364, %s365, %s366
      %p370 = pneg %p364
      %p371 = scmp.eq.s32.totalorder %s37, 1
      %p372 = por %p370, %p371
      %p373 = scmp.ne.s32.totalorder %s365, %s368
      %p374 = scmp.eq.s32.totalorder %s37, 0
      %p375 = por %p373, %p374
      %p376 = scmp.ne.s32.totalorder %s365, %s368
      %p377 = scmp.eq.s32.totalorder %s42, 1
      %p378 = por %p376, %p377
      %p379 = scmp.ne.s32.totalorder %s368, %s369
      %p380 = scmp.eq.s32.totalorder %s42, 0
      %p381 = por %p379, %p380
      %p382 = scmp.ne.s32.totalorder %s368, %s369
      %p383 = scmp.eq.s32.totalorder %s43, 1
      %p384 = por %p382, %p383
      %p386 = scmp.ne.s32.totalorder %s369, %s385
      %p387 = scmp.eq.s32.totalorder %s43, 0
      %p388 = por %p386, %p387
      %s389 = ssub.s32 %s37, %s44
      %p390 = scmp.eq.s32.totalorder %s389, 0
      %s392 = sadd.s32 %s391, 1
      %s393 = scalar_select %p390, %s391, %s392
      %p396 = pneg %p390
      %p397 = scmp.eq.s32.totalorder %s37, 1
      %p398 = por %p396, %p397
      %p399 = scmp.ne.s32.totalorder %s391, %s394
      %p400 = scmp.eq.s32.totalorder %s37, 0
      %p401 = por %p399, %p400
      %p402 = scmp.ne.s32.totalorder %s391, %s394
      %p403 = scmp.eq.s32.totalorder %s42, 1
      %p404 = por %p402, %p403
      %p405 = scmp.ne.s32.totalorder %s394, %s395
      %p406 = scmp.eq.s32.totalorder %s42, 0
      %p407 = por %p405, %p406
      %p408 = scmp.ne.s32.totalorder %s394, %s395
      %p409 = scmp.eq.s32.totalorder %s43, 1
      %p410 = por %p408, %p409
      %p412 = scmp.ne.s32.totalorder %s395, %s411
      %p413 = scmp.eq.s32.totalorder %s43, 0
      %p414 = por %p412, %p413
      %s415 = ssub.s32 %s37, %s44
      %p416 = scmp.eq.s32.totalorder %s415, 0
      %s418 = sadd.s32 %s417, 1
      %s419 = scalar_select %p416, %s417, %s418
      %p422 = pneg %p416
      %p423 = scmp.eq.s32.totalorder %s37, 1
      %p424 = por %p422, %p423
      %p425 = scmp.ne.s32.totalorder %s417, %s420
      %p426 = scmp.eq.s32.totalorder %s37, 0
      %p427 = por %p425, %p426
      %p428 = scmp.ne.s32.totalorder %s417, %s420
      %p429 = scmp.eq.s32.totalorder %s42, 1
      %p430 = por %p428, %p429
      %p431 = scmp.ne.s32.totalorder %s420, %s421
      %p432 = scmp.eq.s32.totalorder %s42, 0
      %p433 = por %p431, %p432
      %p434 = scmp.ne.s32.totalorder %s420, %s421
      %p435 = scmp.eq.s32.totalorder %s43, 1
      %p436 = por %p434, %p435
      %p438 = scmp.ne.s32.totalorder %s421, %s437
      %p439 = scmp.eq.s32.totalorder %s43, 0
      %p440 = por %p438, %p439
      %s442 = sadd.s32 %s441, 1
      %p445 = scmp.eq.s32.totalorder %s37, 1
      %p446 = scmp.ne.s32.totalorder %s441, %s443
      %p447 = scmp.eq.s32.totalorder %s37, 0
      %p448 = por %p446, %p447
      %p449 = scmp.ne.s32.totalorder %s441, %s443
      %p450 = scmp.eq.s32.totalorder %s42, 1
      %p451 = por %p449, %p450
      %p452 = scmp.ne.s32.totalorder %s443, %s444
      %p453 = scmp.eq.s32.totalorder %s42, 0
      %p454 = por %p452, %p453
      %p455 = scmp.ne.s32.totalorder %s443, %s444
      %p456 = scmp.eq.s32.totalorder %s43, 1
      %p457 = por %p455, %p456
      %p459 = scmp.ne.s32.totalorder %s444, %s458
      %p460 = scmp.eq.s32.totalorder %s43, 0
      %p461 = por %p459, %p460
      %s463 = sadd.s32 %s462, 1
      %p466 = scmp.eq.s32.totalorder %s37, 1
      %p467 = scmp.ne.s32.totalorder %s462, %s464
      %p468 = scmp.eq.s32.totalorder %s37, 0
      %p469 = por %p467, %p468
      %p470 = scmp.ne.s32.totalorder %s462, %s464
      %p471 = scmp.eq.s32.totalorder %s42, 1
      %p472 = por %p470, %p471
      %p473 = scmp.ne.s32.totalorder %s464, %s465
      %p474 = scmp.eq.s32.totalorder %s42, 0
      %p475 = por %p473, %p474
      %p476 = scmp.ne.s32.totalorder %s464, %s465
      %p477 = scmp.eq.s32.totalorder %s43, 1
      %p478 = por %p476, %p477
      %p480 = scmp.ne.s32.totalorder %s465, %s479
      %p481 = scmp.eq.s32.totalorder %s43, 0
      %p482 = por %p480, %p481
      %s484 = sadd.s32 %s483, 1
      %p487 = scmp.eq.s32.totalorder %s37, 1
      %p488 = scmp.ne.s32.totalorder %s483, %s485
      %p489 = scmp.eq.s32.totalorder %s37, 0
      %p490 = por %p488, %p489
      %p491 = scmp.ne.s32.totalorder %s483, %s485
      %p492 = scmp.eq.s32.totalorder %s42, 1
      %p493 = por %p491, %p492
      %p494 = scmp.ne.s32.totalorder %s485, %s486
      %p495 = scmp.eq.s32.totalorder %s42, 0
      %p496 = por %p494, %p495
      %p497 = scmp.ne.s32.totalorder %s485, %s486
      %p498 = scmp.eq.s32.totalorder %s43, 1
      %p499 = por %p497, %p498
      %p501 = scmp.ne.s32.totalorder %s486, %s500
      %p502 = scmp.eq.s32.totalorder %s43, 0
      %p503 = por %p501, %p502
      %s505 = sadd.s32 %s504, 1
      %p508 = scmp.eq.s32.totalorder %s37, 1
      %p509 = scmp.ne.s32.totalorder %s504, %s506
      %p510 = scmp.eq.s32.totalorder %s37, 0
      %p511 = por %p509, %p510
      %p512 = scmp.ne.s32.totalorder %s504, %s506
      %p513 = scmp.eq.s32.totalorder %s42, 1
      %p514 = por %p512, %p513
      %p515 = scmp.ne.s32.totalorder %s506, %s507
      %p516 = scmp.eq.s32.totalorder %s42, 0
      %p517 = por %p515, %p516
      %p518 = scmp.ne.s32.totalorder %s506, %s507
      %p519 = scmp.eq.s32.totalorder %s43, 1
      %p520 = por %p518, %p519
      %p522 = scmp.ne.s32.totalorder %s507, %s521
      %p523 = scmp.eq.s32.totalorder %s43, 0
      %p524 = por %p522, %p523
      %s526 = sadd.s32 %s525, 1
      %p529 = scmp.eq.s32.totalorder %s37, 1
      %p530 = scmp.ne.s32.totalorder %s525, %s527
      %p531 = scmp.eq.s32.totalorder %s37, 0
      %p532 = por %p530, %p531
      %p533 = scmp.ne.s32.totalorder %s525, %s527
      %p534 = scmp.eq.s32.totalorder %s42, 1
      %p535 = por %p533, %p534
      %p536 = scmp.ne.s32.totalorder %s527, %s528
      %p537 = scmp.eq.s32.totalorder %s42, 0
      %p538 = por %p536, %p537
      %p539 = scmp.ne.s32.totalorder %s527, %s528
      %p540 = scmp.eq.s32.totalorder %s43, 1
      %p541 = por %p539, %p540
      %p543 = scmp.ne.s32.totalorder %s528, %s542
      %p544 = scmp.eq.s32.totalorder %s43, 0
      %p545 = por %p543, %p544
      %s547 = sadd.s32 %s546, 1
      %p550 = scmp.eq.s32.totalorder %s37, 1
      %p551 = scmp.ne.s32.totalorder %s546, %s548
      %p552 = scmp.eq.s32.totalorder %s37, 0
      %p553 = por %p551, %p552
      %p554 = scmp.ne.s32.totalorder %s546, %s548
      %p555 = scmp.eq.s32.totalorder %s42, 1
      %p556 = por %p554, %p555
      %p557 = scmp.ne.s32.totalorder %s548, %s549
      %p558 = scmp.eq.s32.totalorder %s42, 0
      %p559 = por %p557, %p558
      %p560 = scmp.ne.s32.totalorder %s548, %s549
      %p561 = scmp.eq.s32.totalorder %s43, 1
      %p562 = por %p560, %p561
      %p564 = scmp.ne.s32.totalorder %s549, %s563
      %p565 = scmp.eq.s32.totalorder %s43, 0
      %p566 = por %p564, %p565
      %s568 = sadd.s32 %s567, 1
      %p571 = scmp.eq.s32.totalorder %s37, 1
      %p572 = scmp.ne.s32.totalorder %s567, %s569
      %p573 = scmp.eq.s32.totalorder %s37, 0
      %p574 = por %p572, %p573
      %p575 = scmp.ne.s32.totalorder %s567, %s569
      %p576 = scmp.eq.s32.totalorder %s42, 1
      %p577 = por %p575, %p576
      %p578 = scmp.ne.s32.totalorder %s569, %s570
      %p579 = scmp.eq.s32.totalorder %s42, 0
      %p580 = por %p578, %p579
      %p581 = scmp.ne.s32.totalorder %s569, %s570
      %p582 = scmp.eq.s32.totalorder %s43, 1
      %p583 = por %p581, %p582
      %p585 = scmp.ne.s32.totalorder %s570, %s584
      %p586 = scmp.eq.s32.totalorder %s43, 0
      %p587 = por %p585, %p586
      %p588 = scmp.le.s32.totalorder 1, %s37
      %p589 = scmp.lt.s32.totalorder %s37, 3
      %p590 = pnand %p588, %p589
      %p591 = pneg %p590
      // Predicated region
      $region9: #{bert_classficator_forward.1} parent=5 // pred_check
        _
      $region10: #{bert_classficator_forward.1} parent=5 // pred_check_branch
        %593 = sbr.rel (%p590) target = $region12
      $region11: #{bert_classficator_forward.1} parent=5 // pred_region
        %s594 = ssub.s32 %s37, 1
        // Predicated region
        $region13: #{bert_classficator_forward.1} parent=11 // pred_check
          %p595 = pneg %p58
        $region14: #{bert_classficator_forward.1} parent=11 // pred_check_branch
          %597 = sbr.rel (%p595) target = $region16
        $region15: #{bert_classficator_forward.1} parent=11 // pred_region
          _
        $region16: #{bert_classficator_forward.1} parent=11 // pred_fallthru
          _
        // Predicated region
        $region17: #{bert_classficator_forward.1} parent=11 // pred_check
          %p598 = pneg %p79
        $region18: #{bert_classficator_forward.1} parent=11 // pred_check_branch
          %600 = sbr.rel (%p598) target = $region20
        $region19: #{bert_classficator_forward.1} parent=11 // pred_region
          _
        $region20: #{bert_classficator_forward.1} parent=11 // pred_fallthru
          _
        // Predicated region
        $region21: #{bert_classficator_forward.1} parent=11 // pred_check
          %p601 = pneg %p100
        $region22: #{bert_classficator_forward.1} parent=11 // pred_check_branch
          %603 = sbr.rel (%p601) target = $region24
        $region23: #{bert_classficator_forward.1} parent=11 // pred_region
          _
        $region24: #{bert_classficator_forward.1} parent=11 // pred_fallthru
          _
        // Predicated region
        $region25: #{bert_classficator_forward.1} parent=11 // pred_check
          %p604 = pneg %p121
        $region26: #{bert_classficator_forward.1} parent=11 // pred_check_branch
          %606 = sbr.rel (%p604) target = $region28
        $region27: #{bert_classficator_forward.1} parent=11 // pred_region
          _
        $region28: #{bert_classficator_forward.1} parent=11 // pred_fallthru
          _
        // Predicated region
        $region29: #{bert_classficator_forward.1} parent=11 // pred_check
          %p607 = pneg %p454
        $region30: #{bert_classficator_forward.1} parent=11 // pred_check_branch
          %609 = sbr.rel (%p607) target = $region32
        $region31: #{bert_classficator_forward.1} parent=11 // pred_region
          _
        $region32: #{bert_classficator_forward.1} parent=11 // pred_fallthru
          _
        // Predicated region
        $region33: #{bert_classficator_forward.1} parent=11 // pred_check
          %p610 = pneg %p475
        $region34: #{bert_classficator_forward.1} parent=11 // pred_check_branch
          %612 = sbr.rel (%p610) target = $region36
        $region35: #{bert_classficator_forward.1} parent=11 // pred_region
          _
        $region36: #{bert_classficator_forward.1} parent=11 // pred_fallthru
          _
        // Predicated region
        $region37: #{bert_classficator_forward.1} parent=11 // pred_check
          %p613 = pneg %p496
        $region38: #{bert_classficator_forward.1} parent=11 // pred_check_branch
          %615 = sbr.rel (%p613) target = $region40
        $region39: #{bert_classficator_forward.1} parent=11 // pred_region
          _
        $region40: #{bert_classficator_forward.1} parent=11 // pred_fallthru
          _
        // Predicated region
        $region41: #{bert_classficator_forward.1} parent=11 // pred_check
          %p616 = pneg %p517
        $region42: #{bert_classficator_forward.1} parent=11 // pred_check_branch
          %618 = sbr.rel (%p616) target = $region44
        $region43: #{bert_classficator_forward.1} parent=11 // pred_region
          _
        $region44: #{bert_classficator_forward.1} parent=11 // pred_fallthru
          _
      $region12: #{bert_classficator_forward.1} parent=5 // pred_fallthru
        _
      %p619 = scmp.lt.s32.totalorder %s37, 2
      // Predicated region
      $region45: #{bert_classficator_forward.1} parent=5 // pred_check
        %p620 = pneg %p619
      $region46: #{bert_classficator_forward.1} parent=5 // pred_check_branch
        %622 = sbr.rel (%p620) target = $region48
      $region47: #{bert_classficator_forward.1} parent=5 // pred_region
        // Predicated region
        $region49: #{bert_classficator_forward.1} parent=47 // pred_check
          %p623 = pneg %p141
        $region50: #{bert_classficator_forward.1} parent=47 // pred_check_branch
          %625 = sbr.rel (%p623) target = $region52
        $region51: #{bert_classficator_forward.1} parent=47 // pred_region
          %s626 = sand.u32 %s131, 1
          %s627 = scalar_lea.sflag [#allocation4], %s626
          %s628 = sand.u32 %s131, 1
          %s629 = smul.addr %s628, 192
          %s630 = scalar_lea.vmem [#allocation3], %s629
          %632 = vsyncadd %s627, 0
          %s633 = smul.addr %s37, 48
          %s634 = smul.addr %s633, 4
          %s635 = scalar_lea.hbm %s4, %s634
          %s636 = sshll.u32 %s635, 4
          %s637 = int_to_ptr.hbm [resolvable:$true] %s636
          %s638 = sshll.u32 %s630, 4
          %s639 = int_to_ptr.vmem [resolvable:$true] %s638
          %644 = dma.hbm_to_vmem [thread:$0]  %s637, 3072, %s639, %s627, 192, 192, 12
        $region52: #{bert_classficator_forward.1} parent=47 // pred_fallthru
          _
        // Predicated region
        $region53: #{bert_classficator_forward.1} parent=47 // pred_check
          %p645 = pneg %p167
        $region54: #{bert_classficator_forward.1} parent=47 // pred_check_branch
          %647 = sbr.rel (%p645) target = $region56
        $region55: #{bert_classficator_forward.1} parent=47 // pred_region
          %p648 = scmp.lt.s32.totalorder %s37, 1
          %s649 = scalar_select %p648, %s37, 1
          %s650 = smul.addr %s649, 3
          %s651 = scalar_lea.vmem %s5, %s650
        $region56: #{bert_classficator_forward.1} parent=47 // pred_fallthru
          _
        // Predicated region
        $region57: #{bert_classficator_forward.1} parent=47 // pred_check
          %p652 = pneg %p193
        $region58: #{bert_classficator_forward.1} parent=47 // pred_check_branch
          %654 = sbr.rel (%p652) target = $region60
        $region59: #{bert_classficator_forward.1} parent=47 // pred_region
          %p655 = scmp.lt.s32.totalorder %s37, 1
          %s656 = scalar_select %p655, %s37, 1
          %s657 = smul.addr %s656, 16
          %s658 = smul.addr %s657, 4
          %s659 = scalar_lea.vmem %s6, %s658
        $region60: #{bert_classficator_forward.1} parent=47 // pred_fallthru
          _
        // Predicated region
        $region61: #{bert_classficator_forward.1} parent=47 // pred_check
          %p660 = pneg %p219
        $region62: #{bert_classficator_forward.1} parent=47 // pred_check_branch
          %662 = sbr.rel (%p660) target = $region64
        $region63: #{bert_classficator_forward.1} parent=47 // pred_region
          %p663 = scmp.lt.s32.totalorder %s37, 1
          %s664 = scalar_select %p663, %s37, 1
          %s665 = scalar_lea.vmem %s7, %s664
        $region64: #{bert_classficator_forward.1} parent=47 // pred_fallthru
          _
        // Predicated region
        $region65: #{bert_classficator_forward.1} parent=47 // pred_check
          %p666 = pneg %p245
        $region66: #{bert_classficator_forward.1} parent=47 // pred_check_branch
          %668 = sbr.rel (%p666) target = $region68
        $region67: #{bert_classficator_forward.1} parent=47 // pred_region
          %p669 = scmp.lt.s32.totalorder %s37, 1
          %s670 = scalar_select %p669, %s37, 1
          %s671 = scalar_lea.vmem %s8, %s670
        $region68: #{bert_classficator_forward.1} parent=47 // pred_fallthru
          _
        // Predicated region
        $region69: #{bert_classficator_forward.1} parent=47 // pred_check
          %p672 = pneg %p271
        $region70: #{bert_classficator_forward.1} parent=47 // pred_check_branch
          %674 = sbr.rel (%p672) target = $region72
        $region71: #{bert_classficator_forward.1} parent=47 // pred_region
          %p675 = scmp.lt.s32.totalorder %s37, 1
          %s676 = scalar_select %p675, %s37, 1
          %s677 = scalar_lea.vmem %s9, %s676
        $region72: #{bert_classficator_forward.1} parent=47 // pred_fallthru
          _
        // Predicated region
        $region73: #{bert_classficator_forward.1} parent=47 // pred_check
          %p678 = pneg %p297
        $region74: #{bert_classficator_forward.1} parent=47 // pred_check_branch
          %680 = sbr.rel (%p678) target = $region76
        $region75: #{bert_classficator_forward.1} parent=47 // pred_region
          %s681 = sand.u32 %s37, 1
          %s682 = scalar_lea.sflag [#allocation7], %s681
          %s683 = sand.u32 %s287, 1
          %s684 = smul.addr %s683, 256
          %s685 = scalar_lea.vmem [#allocation6], %s684
          %687 = vsyncadd %s682, 0
          %s688 = smul.addr %s37, 64
          %s689 = smul.addr %s688, 4
          %s690 = scalar_lea.hbm %s10, %s689
          %s691 = sshll.u32 %s690, 4
          %s692 = int_to_ptr.hbm [resolvable:$true] %s691
          %s693 = sshll.u32 %s685, 4
          %s694 = int_to_ptr.vmem [resolvable:$true] %s693
          %699 = dma.hbm_to_vmem [thread:$0]  %s692, 4096, %s694, %s682, 256, 256, 16
        $region76: #{bert_classficator_forward.1} parent=47 // pred_fallthru
          _
        // Predicated region
        $region77: #{bert_classficator_forward.1} parent=47 // pred_check
          %p700 = pneg %p323
        $region78: #{bert_classficator_forward.1} parent=47 // pred_check_branch
          %702 = sbr.rel (%p700) target = $region80
        $region79: #{bert_classficator_forward.1} parent=47 // pred_region
          %p703 = scmp.lt.s32.totalorder %s37, 1
          %s704 = scalar_select %p703, %s37, 1
          %s705 = smul.addr %s704, 4
          %s706 = scalar_lea.vmem %s11, %s705
        $region80: #{bert_classficator_forward.1} parent=47 // pred_fallthru
          _
        // Predicated region
        $region81: #{bert_classficator_forward.1} parent=47 // pred_check
          %p707 = pneg %p349
        $region82: #{bert_classficator_forward.1} parent=47 // pred_check_branch
          %709 = sbr.rel (%p707) target = $region84
        $region83: #{bert_classficator_forward.1} parent=47 // pred_region
          %s710 = sand.u32 %s37, 1
          %s711 = scalar_lea.sflag [#allocation7], %s710
          %s712 = sand.u32 %s339, 1
          %s713 = smul.addr %s712, 256
          %s714 = scalar_lea.vmem [#allocation8], %s713
          %716 = vsyncadd %s711, 0
          %s717 = smul.addr %s37, 64
          %s718 = smul.addr %s717, 4
          %s719 = scalar_lea.hbm %s12, %s718
          %s720 = sshll.u32 %s719, 4
          %s721 = int_to_ptr.hbm [resolvable:$true] %s720
          %s722 = sshll.u32 %s714, 4
          %s723 = int_to_ptr.vmem [resolvable:$true] %s722
          %728 = dma.hbm_to_vmem [thread:$0]  %s721, 4096, %s723, %s711, 64, 64, 4
        $region84: #{bert_classficator_forward.1} parent=47 // pred_fallthru
          _
        // Predicated region
        $region85: #{bert_classficator_forward.1} parent=47 // pred_check
          %p729 = pneg %p375
        $region86: #{bert_classficator_forward.1} parent=47 // pred_check_branch
          %731 = sbr.rel (%p729) target = $region88
        $region87: #{bert_classficator_forward.1} parent=47 // pred_region
          %p732 = scmp.lt.s32.totalorder %s37, 1
          %s733 = scalar_select %p732, %s37, 1
          %s734 = scalar_lea.vmem %s13, %s733
        $region88: #{bert_classficator_forward.1} parent=47 // pred_fallthru
          _
        // Predicated region
        $region89: #{bert_classficator_forward.1} parent=47 // pred_check
          %p735 = pneg %p401
        $region90: #{bert_classficator_forward.1} parent=47 // pred_check_branch
          %737 = sbr.rel (%p735) target = $region92
        $region91: #{bert_classficator_forward.1} parent=47 // pred_region
          %p738 = scmp.lt.s32.totalorder %s37, 1
          %s739 = scalar_select %p738, %s37, 1
          %s740 = scalar_lea.vmem %s14, %s739
        $region92: #{bert_classficator_forward.1} parent=47 // pred_fallthru
          _
        // Predicated region
        $region93: #{bert_classficator_forward.1} parent=47 // pred_check
          %p741 = pneg %p427
        $region94: #{bert_classficator_forward.1} parent=47 // pred_check_branch
          %743 = sbr.rel (%p741) target = $region96
        $region95: #{bert_classficator_forward.1} parent=47 // pred_region
          %p744 = scmp.lt.s32.totalorder %s37, 1
          %s745 = scalar_select %p744, %s37, 1
          %s746 = scalar_lea.vmem %s15, %s745
        $region96: #{bert_classficator_forward.1} parent=47 // pred_fallthru
          _
      $region48: #{bert_classficator_forward.1} parent=5 // pred_fallthru
        _
      %p747 = scmp.le.s32.totalorder 1, %s37
      %p748 = scmp.lt.s32.totalorder %s37, 3
      %p749 = pnand %p747, %p748
      %p750 = pneg %p749
      // Predicated region
      $region97: #{bert_classficator_forward.1} parent=5 // pred_check
        _
      $region98: #{bert_classficator_forward.1} parent=5 // pred_check_branch
        %752 = sbr.rel (%p749) target = $region100
      $region99: #{bert_classficator_forward.1} parent=5 // pred_region
        %s753 = ssub.s32 %s37, 1
        %s754 = sand.u32 %s134, 1
        %s755 = scalar_lea.sflag [#allocation4], %s754
        %s756 = sand.u32 %s134, 1
        %s757 = smul.addr %s756, 192
        %s758 = scalar_lea.vmem [#allocation3], %s757
        // Predicated region
        $region101: #{bert_classficator_forward.1} parent=99 // pred_check
          %p759 = pneg %p147
        $region102: #{bert_classficator_forward.1} parent=99 // pred_check_branch
          %761 = sbr.rel (%p759) target = $region104
        $region103: #{bert_classficator_forward.1} parent=99 // pred_region
          %763 = dma.done %s755, 3072
        $region104: #{bert_classficator_forward.1} parent=99 // pred_fallthru
          _
        %s764 = sand.u32 %s42, 1
        %s765 = scalar_lea.sflag [#allocation7], %s764
        %s766 = sand.u32 %s290, 1
        %s767 = smul.addr %s766, 256
        %s768 = scalar_lea.vmem [#allocation6], %s767
        // Predicated region
        $region105: #{bert_classficator_forward.1} parent=99 // pred_check
          %p769 = pneg %p303
        $region106: #{bert_classficator_forward.1} parent=99 // pred_check_branch
          %771 = sbr.rel (%p769) target = $region108
        $region107: #{bert_classficator_forward.1} parent=99 // pred_region
          %773 = dma.done %s765, 4096
        $region108: #{bert_classficator_forward.1} parent=99 // pred_fallthru
          _
        %s774 = sand.u32 %s42, 1
        %s775 = scalar_lea.sflag [#allocation7], %s774
        %s776 = sand.u32 %s342, 1
        %s777 = smul.addr %s776, 256
        %s778 = scalar_lea.vmem [#allocation8], %s777
        // Predicated region
        $region109: #{bert_classficator_forward.1} parent=99 // pred_check
          %p779 = pneg %p355
        $region110: #{bert_classficator_forward.1} parent=99 // pred_check_branch
          %781 = sbr.rel (%p779) target = $region112
        $region111: #{bert_classficator_forward.1} parent=99 // pred_region
          %783 = dma.done %s775, 4096
        $region112: #{bert_classficator_forward.1} parent=99 // pred_fallthru
          _
        %p784 = pneg %p58
        %p785 = pneg %p55
        %p786 = pneg %p79
        %p787 = pneg %p76
        %p788 = pneg %p100
        %p789 = pneg %p97
        %p790 = pneg %p121
        %p791 = pneg %p118
        %s792 = sand.u32 %s134, 1
        %s793 = scalar_lea.sflag [#allocation4], %s792
        %s794 = sand.u32 %s134, 1
        %s795 = smul.addr %s794, 192
        %s796 = scalar_lea.vmem [#allocation3], %s795
        %p797 = pneg %p147
        %p798 = pneg %p144
        %p799 = scmp.lt.s32.totalorder %s42, 1
        %s800 = scalar_select %p799, %s42, 1
        %s801 = smul.addr %s800, 3
        %s802 = scalar_lea.vmem %s5, %s801
        %p803 = pneg %p173
        %p804 = pneg %p170
        %p805 = scmp.lt.s32.totalorder %s42, 1
        %s806 = scalar_select %p805, %s42, 1
        %s807 = smul.addr %s806, 16
        %s808 = smul.addr %s807, 4
        %s809 = scalar_lea.vmem %s6, %s808
        %p810 = pneg %p199
        %p811 = pneg %p196
        %p812 = scmp.lt.s32.totalorder %s42, 1
        %s813 = scalar_select %p812, %s42, 1
        %s814 = scalar_lea.vmem %s7, %s813
        %p815 = pneg %p225
        %p816 = pneg %p222
        %p817 = scmp.lt.s32.totalorder %s42, 1
        %s818 = scalar_select %p817, %s42, 1
        %s819 = scalar_lea.vmem %s8, %s818
        %p820 = pneg %p251
        %p821 = pneg %p248
        %p822 = scmp.lt.s32.totalorder %s42, 1
        %s823 = scalar_select %p822, %s42, 1
        %s824 = scalar_lea.vmem %s9, %s823
        %p825 = pneg %p277
        %p826 = pneg %p274
        %s827 = sand.u32 %s42, 1
        %s828 = scalar_lea.sflag [#allocation7], %s827
        %s829 = sand.u32 %s290, 1
        %s830 = smul.addr %s829, 256
        %s831 = scalar_lea.vmem [#allocation6], %s830
        %p832 = pneg %p303
        %p833 = pneg %p300
        %p834 = scmp.lt.s32.totalorder %s42, 1
        %s835 = scalar_select %p834, %s42, 1
        %s836 = smul.addr %s835, 4
        %s837 = scalar_lea.vmem %s11, %s836
        %p838 = pneg %p329
        %p839 = pneg %p326
        %s840 = sand.u32 %s42, 1
        %s841 = scalar_lea.sflag [#allocation7], %s840
        %s842 = sand.u32 %s342, 1
        %s843 = smul.addr %s842, 256
        %s844 = scalar_lea.vmem [#allocation8], %s843
        %p845 = pneg %p355
        %p846 = pneg %p352
        %p847 = scmp.lt.s32.totalorder %s42, 1
        %s848 = scalar_select %p847, %s42, 1
        %s849 = scalar_lea.vmem %s13, %s848
        %p850 = pneg %p381
        %p851 = pneg %p378
        %p852 = scmp.lt.s32.totalorder %s42, 1
        %s853 = scalar_select %p852, %s42, 1
        %s854 = scalar_lea.vmem %s14, %s853
        %p855 = pneg %p407
        %p856 = pneg %p404
        %p857 = scmp.lt.s32.totalorder %s42, 1
        %s858 = scalar_select %p857, %s42, 1
        %s859 = scalar_lea.vmem %s15, %s858
        %p860 = pneg %p433
        %p861 = pneg %p430
        %p862 = pneg %p454
        %p863 = pneg %p451
        %p864 = pneg %p475
        %p865 = pneg %p472
        %p866 = pneg %p496
        %p867 = pneg %p493
        %p868 = pneg %p517
        %p869 = pneg %p514
        %p870 = pneg %p538
        %p871 = pneg %p535
        %p872 = pneg %p559
        %p873 = pneg %p556
        %p874 = pneg %p580
        %p875 = pneg %p577
        %p876 = scmp.lt.s32.totalorder %s42, 1
        %s877 = scalar_select %p876, %s42, 1
        %s878 = smul.addr %s877, 3
        %s879 = scalar_lea.vmem %s5, %s878
        %p880 = scmp.lt.s32.totalorder %s42, 1
        %s881 = scalar_select %p880, %s42, 1
        %s882 = smul.addr %s881, 16
        %s883 = smul.addr %s882, 4
        %s884 = scalar_lea.vmem %s6, %s883
        %p885 = scmp.lt.s32.totalorder %s42, 1
        %s886 = scalar_select %p885, %s42, 1
        %s887 = scalar_lea.vmem %s7, %s886
        %p888 = scmp.lt.s32.totalorder %s42, 1
        %s889 = scalar_select %p888, %s42, 1
        %s890 = scalar_lea.vmem %s8, %s889
        %p891 = scmp.lt.s32.totalorder %s42, 1
        %s892 = scalar_select %p891, %s42, 1
        %s893 = scalar_lea.vmem %s9, %s892
        %p894 = scmp.lt.s32.totalorder %s42, 1
        %s895 = scalar_select %p894, %s42, 1
        %s896 = smul.addr %s895, 4
        %s897 = scalar_lea.vmem %s11, %s896
        %p898 = scmp.lt.s32.totalorder %s42, 1
        %s899 = scalar_select %p898, %s42, 1
        %s900 = scalar_lea.vmem %s13, %s899
        %p901 = scmp.lt.s32.totalorder %s42, 1
        %s902 = scalar_select %p901, %s42, 1
        %s903 = scalar_lea.vmem %s14, %s902
        %p904 = scmp.lt.s32.totalorder %s42, 1
        %s905 = scalar_select %p904, %s42, 1
        %s906 = scalar_lea.vmem %s15, %s905
        %p908 = scmp.eq.s32.totalorder %s42, 0
        // Predicated region
        $region113: #{bert_classficator_forward.1} parent=99 // pred_check
          %p909 = pneg %p908
        $region114: #{bert_classficator_forward.1} parent=99 // pred_check_branch
          %911 = sbr.rel (%p909) target = $region116
        $region115: #{bert_classficator_forward.1} parent=99 // pred_region
          %v912 = vld [vmem:[%s0] sm:$0xff]
          %v913 = vld [vmem:[%s0 + $0x8] sm:$0xff]
          %v914 = vld [vmem:[%s2] sm:$0x1]
          %v915 = vld [vmem:[%s3] sm:$0x1]
          %916 = vadd.xlane.f32.xlu0 %v912
          %v917 = vpop.xlane.xlu0 %916
          %918 = vadd.xlane.f32.xlu0 %v913
          %v919 = vpop.xlane.xlu0 %918
          %v920 = vrcp.pop 128.0
          %v921 = vmul.f32 128.0, %v920
          %v922 = vsub.f32 1.0, %v921
          %v923 = vmul.f32 %v920, %v922
          %v924 = vadd.f32 %v920, %v923
          %vm925 = vweird.f32 %v920
          %v926 = vsel %vm925, %v920, %v924
          %v927 = vmul.f32 %v917, %v926
          %v928 = vmul.f32 %v919, %v926
          %v929 = vsub.f32 %v912, %v927
          %v930 = vsub.f32 %v913, %v928
          %v931 = vmul.f32 %v929, %v929
          %v932 = vmul.f32 %v930, %v930
          %933 = vadd.xlane.f32.xlu0 %v931
          %v934 = vpop.xlane.xlu0 %933
          %935 = vadd.xlane.f32.xlu0 %v932
          %v936 = vpop.xlane.xlu0 %935
          %v937 = vmul.f32 %v934, %v926
          %v938 = vmul.f32 %v936, %v926
          %v939 = vadd.f32 %v937, 1e-12
          %v940 = vadd.f32 %v938, 1e-12
          %v941 = vrsqrt.pop %v939
          %v942 = vmul.f32 %v941, %v939
          %v943 = vmul.f32 %v942, %v941
          %v944 = vmul.f32 0.5, %v943
          %v945 = vsub.f32 1.5, %v944
          %v946 = vmul.f32 %v941, %v945
          %vm947 = vweird.f32 %v939
          %vm948 = vweird.f32 %v941
          %vm949 = vmor %vm947, %vm948
          %v950 = vsel %vm949, %v941, %v946
          %v951 = vrsqrt.pop %v940
          %v952 = vmul.f32 %v951, %v940
          %v953 = vmul.f32 %v952, %v951
          %v954 = vmul.f32 0.5, %v953
          %v955 = vsub.f32 1.5, %v954
          %v956 = vmul.f32 %v951, %v955
          %vm957 = vweird.f32 %v940
          %vm958 = vweird.f32 %v951
          %vm959 = vmor %vm957, %vm958
          %v960 = vsel %vm959, %v951, %v956
          %v961 = vmul.f32 %v929, %v950
          %v962 = vmul.f32 %v930, %v960
          %v964 = vperm.slane %v914, 0
          %v966 = vmul.f32 %v961, %v964
          %v967 = vmul.f32 %v962, %v964
          %v969 = vperm.slane %v915, 0
          %v971 = vadd.f32 %v966, %v969
          %v972 = vadd.f32 %v967, %v969
          %973 = vst [vmem:[#allocation2] sm:$0xff] %v971
          %974 = vst [vmem:[#allocation2 + $0x8] sm:$0xff] %v972
        $region116: #{bert_classficator_forward.1} parent=99 // pred_fallthru
          _
        %v975 = vld [vmem:[#allocation2] sm:$0xff]
        %v976 = vld [vmem:[#allocation2 + $0x8] sm:$0xff]
        %v977 = vld [vmem:[%s758] sm:$0xff]
        %v978 = vld [vmem:[%s758 + $0x8] sm:$0xf]
        %v979 = vld [vmem:[%s758 + $0xc] sm:$0xff]
        %v980 = vld [vmem:[%s758 + $0x14] sm:$0xf]
        %v981 = vld [vmem:[%s758 + $0x18] sm:$0xff]
        %v982 = vld [vmem:[%s758 + $0x20] sm:$0xf]
        %v983 = vld [vmem:[%s758 + $0x24] sm:$0xff]
        %v984 = vld [vmem:[%s758 + $0x2c] sm:$0xf]
        %v985 = vld [vmem:[%s758 + $0x30] sm:$0xff]
        %v986 = vld [vmem:[%s758 + $0x38] sm:$0xf]
        %v987 = vld [vmem:[%s758 + $0x3c] sm:$0xff]
        %v988 = vld [vmem:[%s758 + $0x44] sm:$0xf]
        %v989 = vld [vmem:[%s758 + $0x48] sm:$0xff]
        %v990 = vld [vmem:[%s758 + $0x50] sm:$0xf]
        %v991 = vld [vmem:[%s758 + $0x54] sm:$0xff]
        %v992 = vld [vmem:[%s758 + $0x5c] sm:$0xf]
        %v993 = vld [vmem:[%s758 + $0x60] sm:$0xff]
        %v994 = vld [vmem:[%s758 + $0x68] sm:$0xf]
        %v995 = vld [vmem:[%s758 + $0x6c] sm:$0xff]
        %v996 = vld [vmem:[%s758 + $0x74] sm:$0xf]
        %v997 = vld [vmem:[%s758 + $0x78] sm:$0xff]
        %v998 = vld [vmem:[%s758 + $0x80] sm:$0xf]
        %v999 = vld [vmem:[%s758 + $0x84] sm:$0xff]
        %v1000 = vld [vmem:[%s758 + $0x8c] sm:$0xf]
        %v1001 = vld [vmem:[%s758 + $0x90] sm:$0xff]
        %v1002 = vld [vmem:[%s758 + $0x98] sm:$0xf]
        %v1003 = vld [vmem:[%s758 + $0x9c] sm:$0xff]
        %v1004 = vld [vmem:[%s758 + $0xa4] sm:$0xf]
        %v1005 = vld [vmem:[%s758 + $0xa8] sm:$0xff]
        %v1006 = vld [vmem:[%s758 + $0xb0] sm:$0xf]
        %v1007 = vld [vmem:[%s758 + $0xb4] sm:$0xff]
        %v1008 = vld [vmem:[%s758 + $0xbc] sm:$0xf]
        %v1009 = vpack.c.bf16 %v976, %v975
        %v1010 = vld [vmem:[%s879] sm:$0x7]
        %v1012 = vperm.slane %v1010, 0
        %v1013 = vperm.slane %v1010, 1
        %v1014 = vperm.slane %v1010, 2
        %v1050 = vunpack.c.l.b16 %v977
        %v1051 = vunpack.c.h.b16 %v977
        %v1052 = vunpack.c.l.b16 %v978
        %v1053 = vunpack.c.l.b16 %v979
        %v1054 = vunpack.c.h.b16 %v979
        %v1055 = vunpack.c.l.b16 %v980
        %v1056 = vunpack.c.l.b16 %v981
        %v1057 = vunpack.c.h.b16 %v981
        %v1058 = vunpack.c.l.b16 %v982
        %v1059 = vunpack.c.l.b16 %v983
        %v1060 = vunpack.c.h.b16 %v983
        %v1061 = vunpack.c.l.b16 %v984
        %v1062 = vunpack.c.l.b16 %v985
        %v1063 = vunpack.c.h.b16 %v985
        %v1064 = vunpack.c.l.b16 %v986
        %v1065 = vunpack.c.l.b16 %v987
        %v1066 = vunpack.c.h.b16 %v987
        %v1067 = vunpack.c.l.b16 %v988
        %v1068 = vunpack.c.l.b16 %v989
        %v1069 = vunpack.c.h.b16 %v989
        %v1070 = vunpack.c.l.b16 %v990
        %v1071 = vunpack.c.l.b16 %v991
        %v1072 = vunpack.c.h.b16 %v991
        %v1073 = vunpack.c.l.b16 %v992
        %v1074 = vunpack.c.l.b16 %v993
        %v1075 = vunpack.c.h.b16 %v993
        %v1076 = vunpack.c.l.b16 %v994
        %v1077 = vunpack.c.l.b16 %v995
        %v1078 = vunpack.c.h.b16 %v995
        %v1079 = vunpack.c.l.b16 %v996
        %v1080 = vunpack.c.l.b16 %v997
        %v1081 = vunpack.c.h.b16 %v997
        %v1082 = vunpack.c.l.b16 %v998
        %v1083 = vunpack.c.l.b16 %v999
        %v1084 = vunpack.c.h.b16 %v999
        %v1085 = vunpack.c.l.b16 %v1000
        %v1086 = vunpack.c.l.b16 %v1001
        %v1087 = vunpack.c.h.b16 %v1001
        %v1088 = vunpack.c.l.b16 %v1002
        %v1089 = vunpack.c.l.b16 %v1003
        %v1090 = vunpack.c.h.b16 %v1003
        %v1091 = vunpack.c.l.b16 %v1004
        %v1092 = vunpack.c.l.b16 %v1005
        %v1093 = vunpack.c.h.b16 %v1005
        %v1094 = vunpack.c.l.b16 %v1006
        %v1095 = vunpack.c.l.b16 %v1007
        %v1096 = vunpack.c.h.b16 %v1007
        %v1097 = vunpack.c.l.b16 %v1008
        %v1098 = vpack.c.b16 %v1053, %v1050
        %v1099 = vpack.c.b16 %v1054, %v1051
        %v1100 = vpack.c.b16 %v1055, %v1052
        %v1101 = vpack.c.b16 %v1059, %v1056
        %v1102 = vpack.c.b16 %v1060, %v1057
        %v1103 = vpack.c.b16 %v1061, %v1058
        %v1104 = vpack.c.b16 %v1065, %v1062
        %v1105 = vpack.c.b16 %v1066, %v1063
        %v1106 = vpack.c.b16 %v1067, %v1064
        %v1107 = vpack.c.b16 %v1071, %v1068
        %v1108 = vpack.c.b16 %v1072, %v1069
        %v1109 = vpack.c.b16 %v1073, %v1070
        %v1110 = vpack.c.b16 %v1077, %v1074
        %v1111 = vpack.c.b16 %v1078, %v1075
        %v1112 = vpack.c.b16 %v1079, %v1076
        %v1113 = vpack.c.b16 %v1083, %v1080
        %v1114 = vpack.c.b16 %v1084, %v1081
        %v1115 = vpack.c.b16 %v1085, %v1082
        %v1116 = vpack.c.b16 %v1089, %v1086
        %v1117 = vpack.c.b16 %v1090, %v1087
        %v1118 = vpack.c.b16 %v1091, %v1088
        %v1119 = vpack.c.b16 %v1095, %v1092
        %v1120 = vpack.c.b16 %v1096, %v1093
        %v1121 = vpack.c.b16 %v1097, %v1094
        %1146 = vmatpush.bf16.msra.mxu0 %v1119
        %1147 = vmatpush.bf16.msra.mxu0 %v1116
        %1148 = vmatpush.bf16.msra.mxu0 %v1113
        %1149 = vmatpush.bf16.msra.mxu0 %v1110
        %1150 = vmatpush.bf16.msra.mxu0 %v1107
        %1151 = vmatpush.bf16.msra.mxu0 %v1104
        %1152 = vmatpush.bf16.msra.mxu0 %v1101
        %1153 = vmatpush.bf16.msra.mxu0 %v1098
        %1154 = vmatmul.bf16.gmra.mxu0 %v1009
        %v1155 = vpop.f32.mrf.mxu0
        %v1156 = vadd.f32 %v1012, %v1155
        %v1157 = vpop.f32.mrf.mxu0
        %v1158 = vadd.f32 %v1012, %v1157
        %1159 = vdwg.mxu0
        %1160 = vmatpush.bf16.msra.mxu0 %v1120
        %1161 = vmatpush.bf16.msra.mxu0 %v1117
        %1162 = vmatpush.bf16.msra.mxu0 %v1114
        %1163 = vmatpush.bf16.msra.mxu0 %v1111
        %1164 = vmatpush.bf16.msra.mxu0 %v1108
        %1165 = vmatpush.bf16.msra.mxu0 %v1105
        %1166 = vmatpush.bf16.msra.mxu0 %v1102
        %1167 = vmatpush.bf16.msra.mxu0 %v1099
        %1168 = vmatmul.bf16.gmra.mxu0 %v1009
        %v1169 = vpop.f32.mrf.mxu0
        %v1170 = vadd.f32 %v1013, %v1169
        %v1171 = vpop.f32.mrf.mxu0
        %v1172 = vadd.f32 %v1013, %v1171
        %1173 = vdwg.mxu0
        %1174 = vmatpush.bf16.msra.mxu0 %v1121
        %1175 = vmatpush.bf16.msra.mxu0 %v1118
        %1176 = vmatpush.bf16.msra.mxu0 %v1115
        %1177 = vmatpush.bf16.msra.mxu0 %v1112
        %1178 = vmatpush.bf16.msra.mxu0 %v1109
        %1179 = vmatpush.bf16.msra.mxu0 %v1106
        %1180 = vmatpush.bf16.msra.mxu0 %v1103
        %1181 = vmatpush.bf16.msra.mxu0 %v1100
        %1182 = vmatmul.bf16.gmra.mxu0 %v1009
        %v1183 = vpop.f32.mrf.mxu0
        %v1184 = vadd.f32 %v1014, %v1183
        %v1185 = vpop.f32.mrf.mxu0
        %v1186 = vadd.f32 %v1014, %v1185
        %1187 = vdwg.mxu0
        %1190 = vrot.lane.b32.xlu0 %v1156, 64
        %v1191 = vpop.permute.xlu0 %1190
        %1192 = vrot.lane.b32.xlu0 %v1158, 64
        %v1193 = vpop.permute.xlu0 %1192
        %v1196 = vpack.c.bf16 %v1156, %v1156
        %v1197 = vpack.c.bf16 %v1158, %v1158
        %v1198 = vpack.c.bf16 %v1191, %v1191
        %v1199 = vpack.c.bf16 %v1193, %v1193
        %1202 = vrot.lane.b32.xlu0 %v1170, 64
        %v1203 = vpop.permute.xlu0 %1202
        %1204 = vrot.lane.b32.xlu0 %v1172, 64
        %v1205 = vpop.permute.xlu0 %1204
        %v1208 = vpack.c.bf16 %v1170, %v1170
        %v1209 = vpack.c.bf16 %v1172, %v1172
        %v1210 = vpack.c.bf16 %v1203, %v1203
        %v1211 = vpack.c.bf16 %v1205, %v1205
        %1214 = vrot.lane.b32.xlu0 %v1184, 64
        %v1215 = vpop.permute.xlu0 %1214
        %1216 = vrot.lane.b32.xlu0 %v1186, 64
        %v1217 = vpop.permute.xlu0 %1216
        %v1220 = vpack.c.bf16 %v1184, %v1184
        %v1221 = vpack.c.bf16 %v1186, %v1186
        %v1222 = vpack.c.bf16 %v1215, %v1215
        %v1223 = vpack.c.bf16 %v1217, %v1217
        %v1224 = vld [vmem:[%s1] sm:$0x1]
        %v1225 = vld [vmem:[%s1 + $0x1] sm:$0x1]
        %v1226 = vld [vmem:[%s1 + $0x2] sm:$0x1]
        %v1227 = vld [vmem:[%s1 + $0x3] sm:$0x1]
        %v1232 = vperm.slane %v1224, 0
        %v1233 = vperm.slane %v1225, 0
        %v1234 = vperm.slane %v1226, 0
        %v1235 = vperm.slane %v1227, 0
        %vm1240 = vcmask 523264
        %v1242 = vsel %vm1240, %v1196, 0
        %v1245 = vsel %vm1240, %v1208, 0
        %1247 = vmatpush.bf16.xpose.msra.mxu0 0
        %1248 = vmatpush.bf16.xpose.msra.mxu0 0
        %1249 = vmatpush.bf16.xpose.msra.mxu0 0
        %1250 = vmatpush.bf16.xpose.msra.mxu0 0
        %1251 = vmatpush.bf16.xpose.msra.mxu0 0
        %1252 = vmatpush.bf16.xpose.msra.mxu0 0
        %1253 = vmatpush.bf16.xpose.msra.mxu0 0
        %1254 = vmatpush.bf16.xpose.msra.mxu0 %v1245
        %1255 = vmatmul.bf16.gmra.mxu0 %v1242
        %v1256 = vpop.f32.mrf.mxu0
        %v1257 = vadd.f32 %v1232, %v1256
        %v1258 = vpop.f32.mrf.mxu0
        %1259 = vdwg.mxu0
        %v1261 = vsel %vm1240, %v1197, 0
        %v1264 = vsel %vm1240, %v1209, 0
        %1266 = vmatpush.bf16.xpose.msra.mxu0 0
        %1267 = vmatpush.bf16.xpose.msra.mxu0 0
        %1268 = vmatpush.bf16.xpose.msra.mxu0 0
        %1269 = vmatpush.bf16.xpose.msra.mxu0 0
        %1270 = vmatpush.bf16.xpose.msra.mxu0 0
        %1271 = vmatpush.bf16.xpose.msra.mxu0 0
        %1272 = vmatpush.bf16.xpose.msra.mxu0 0
        %1273 = vmatpush.bf16.xpose.msra.mxu0 %v1264
        %1274 = vmatmul.bf16.gmra.mxu0 %v1261
        %v1275 = vpop.f32.mrf.mxu0
        %v1276 = vadd.f32 %v1233, %v1275
        %v1277 = vpop.f32.mrf.mxu0
        %1278 = vdwg.mxu0
        %v1280 = vsel %vm1240, %v1198, 0
        %v1283 = vsel %vm1240, %v1210, 0
        %1285 = vmatpush.bf16.xpose.msra.mxu0 0
        %1286 = vmatpush.bf16.xpose.msra.mxu0 0
        %1287 = vmatpush.bf16.xpose.msra.mxu0 0
        %1288 = vmatpush.bf16.xpose.msra.mxu0 0
        %1289 = vmatpush.bf16.xpose.msra.mxu0 0
        %1290 = vmatpush.bf16.xpose.msra.mxu0 0
        %1291 = vmatpush.bf16.xpose.msra.mxu0 0
        %1292 = vmatpush.bf16.xpose.msra.mxu0 %v1283
        %1293 = vmatmul.bf16.gmra.mxu0 %v1280
        %v1294 = vpop.f32.mrf.mxu0
        %v1295 = vadd.f32 %v1234, %v1294
        %v1296 = vpop.f32.mrf.mxu0
        %1297 = vdwg.mxu0
        %v1299 = vsel %vm1240, %v1199, 0
        %v1302 = vsel %vm1240, %v1211, 0
        %1304 = vmatpush.bf16.xpose.msra.mxu0 0
        %1305 = vmatpush.bf16.xpose.msra.mxu0 0
        %1306 = vmatpush.bf16.xpose.msra.mxu0 0
        %1307 = vmatpush.bf16.xpose.msra.mxu0 0
        %1308 = vmatpush.bf16.xpose.msra.mxu0 0
        %1309 = vmatpush.bf16.xpose.msra.mxu0 0
        %1310 = vmatpush.bf16.xpose.msra.mxu0 0
        %1311 = vmatpush.bf16.xpose.msra.mxu0 %v1302
        %1312 = vmatmul.bf16.gmra.mxu0 %v1299
        %v1313 = vpop.f32.mrf.mxu0
        %v1314 = vadd.f32 %v1235, %v1313
        %v1315 = vpop.f32.mrf.mxu0
        %1316 = vdwg.mxu0
        %vm1317 = vcmask 64512
        %v1318 = vsel %vm1317, %v1257, -inf
        %1319 = vmax.xlane.f32.xlu0 %v1318
        %v1320 = vpop.xlane.xlu0 %1319
        %v1321 = vsel %vm1317, %v1276, -inf
        %1322 = vmax.xlane.f32.xlu0 %v1321
        %v1323 = vpop.xlane.xlu0 %1322
        %v1324 = vsel %vm1317, %v1295, -inf
        %1325 = vmax.xlane.f32.xlu0 %v1324
        %v1326 = vpop.xlane.xlu0 %1325
        %v1327 = vsel %vm1317, %v1314, -inf
        %1328 = vmax.xlane.f32.xlu0 %v1327
        %v1329 = vpop.xlane.xlu0 %1328
        %v1330 = vsub.f32 %v1257, %v1320
        %v1331 = vsub.f32 %v1276, %v1323
        %v1332 = vsub.f32 %v1295, %v1326
        %v1333 = vsub.f32 %v1314, %v1329
        %v1334 = vmul.f32 %v1330, 1.442695
        %v1335 = vpow.pop %v1334
        %v1336 = vmul.f32 %v1331, 1.442695
        %v1337 = vpow.pop %v1336
        %v1338 = vmul.f32 %v1332, 1.442695
        %v1339 = vpow.pop %v1338
        %v1340 = vmul.f32 %v1333, 1.442695
        %v1341 = vpow.pop %v1340
        %v1342 = vsel %vm1317, %v1335, 0.0
        %1343 = vadd.xlane.f32.xlu0 %v1342
        %v1344 = vpop.xlane.xlu0 %1343
        %v1345 = vsel %vm1317, %v1337, 0.0
        %1346 = vadd.xlane.f32.xlu0 %v1345
        %v1347 = vpop.xlane.xlu0 %1346
        %v1348 = vsel %vm1317, %v1339, 0.0
        %1349 = vadd.xlane.f32.xlu0 %v1348
        %v1350 = vpop.xlane.xlu0 %1349
        %v1351 = vsel %vm1317, %v1341, 0.0
        %1352 = vadd.xlane.f32.xlu0 %v1351
        %v1353 = vpop.xlane.xlu0 %1352
        %v1354 = vrcp.pop %v1344
        %v1355 = vrcp.pop %v1347
        %v1356 = vrcp.pop %v1350
        %v1357 = vrcp.pop %v1353
        %v1358 = vmul.f32 %v1335, %v1354
        %v1359 = vmul.f32 %v1337, %v1355
        %v1360 = vmul.f32 %v1339, %v1356
        %v1361 = vmul.f32 %v1341, %v1357
        %v1362 = vpack.c.bf16 %v1358, %v1358
        %v1363 = vpack.c.bf16 %v1359, %v1359
        %v1364 = vpack.c.bf16 %v1360, %v1360
        %v1365 = vpack.c.bf16 %v1361, %v1361
        %v1367 = vsel %vm1317, %v1362, 0
        %vm1369 = vcmask 1043456
        %v1371 = vsel %vm1369, %v1220, 0
        %1373 = vmatpush.bf16.msra.mxu0 0
        %1374 = vmatpush.bf16.msra.mxu0 0
        %1375 = vmatpush.bf16.msra.mxu0 0
        %1376 = vmatpush.bf16.msra.mxu0 0
        %1377 = vmatpush.bf16.msra.mxu0 0
        %1378 = vmatpush.bf16.msra.mxu0 0
        %1379 = vmatpush.bf16.msra.mxu0 0
        %1380 = vmatpush.bf16.msra.mxu0 %v1371
        %1381 = vmatmul.bf16.gmra.mxu0 %v1367
        %v1382 = vpop.f32.mrf.mxu0
        %v1383 = vadd.f32 0.0, %v1382
        %v1384 = vpop.f32.mrf.mxu0
        %1385 = vdwg.mxu0
        %v1387 = vsel %vm1317, %v1363, 0
        %v1390 = vsel %vm1369, %v1221, 0
        %1392 = vmatpush.bf16.msra.mxu0 0
        %1393 = vmatpush.bf16.msra.mxu0 0
        %1394 = vmatpush.bf16.msra.mxu0 0
        %1395 = vmatpush.bf16.msra.mxu0 0
        %1396 = vmatpush.bf16.msra.mxu0 0
        %1397 = vmatpush.bf16.msra.mxu0 0
        %1398 = vmatpush.bf16.msra.mxu0 0
        %1399 = vmatpush.bf16.msra.mxu0 %v1390
        %1400 = vmatmul.bf16.gmra.mxu0 %v1387
        %v1401 = vpop.f32.mrf.mxu0
        %v1402 = vadd.f32 0.0, %v1401
        %v1403 = vpop.f32.mrf.mxu0
        %1404 = vdwg.mxu0
        %v1406 = vsel %vm1317, %v1364, 0
        %v1409 = vsel %vm1369, %v1222, 0
        %1411 = vmatpush.bf16.msra.mxu0 0
        %1412 = vmatpush.bf16.msra.mxu0 0
        %1413 = vmatpush.bf16.msra.mxu0 0
        %1414 = vmatpush.bf16.msra.mxu0 0
        %1415 = vmatpush.bf16.msra.mxu0 0
        %1416 = vmatpush.bf16.msra.mxu0 0
        %1417 = vmatpush.bf16.msra.mxu0 0
        %1418 = vmatpush.bf16.msra.mxu0 %v1409
        %1419 = vmatmul.bf16.gmra.mxu0 %v1406
        %v1420 = vpop.f32.mrf.mxu0
        %v1421 = vadd.f32 0.0, %v1420
        %v1422 = vpop.f32.mrf.mxu0
        %1423 = vdwg.mxu0
        %v1425 = vsel %vm1317, %v1365, 0
        %v1428 = vsel %vm1369, %v1223, 0
        %1430 = vmatpush.bf16.msra.mxu0 0
        %1431 = vmatpush.bf16.msra.mxu0 0
        %1432 = vmatpush.bf16.msra.mxu0 0
        %1433 = vmatpush.bf16.msra.mxu0 0
        %1434 = vmatpush.bf16.msra.mxu0 0
        %1435 = vmatpush.bf16.msra.mxu0 0
        %1436 = vmatpush.bf16.msra.mxu0 0
        %1437 = vmatpush.bf16.msra.mxu0 %v1428
        %1438 = vmatmul.bf16.gmra.mxu0 %v1425
        %v1439 = vpop.f32.mrf.mxu0
        %v1440 = vadd.f32 0.0, %v1439
        %v1441 = vpop.f32.mrf.mxu0
        %1442 = vdwg.mxu0
        %1445 = vrot.lane.b32.xlu0 %v1421, 64
        %v1446 = vpop.permute.xlu0 %1445
        %1447 = vrot.lane.b32.xlu0 %v1440, 64
        %v1448 = vpop.permute.xlu0 %1447
        %v1451 = vsel %vm1240, %v1383, %v1446
        %v1452 = vsel %vm1240, %v1402, %v1448
        %v1453 = vld [vmem:[%s884] sm:$0xf]
        %v1454 = vld [vmem:[%s884 + $0x4] sm:$0xf]
        %v1455 = vld [vmem:[%s884 + $0x8] sm:$0xf]
        %v1456 = vld [vmem:[%s884 + $0xc] sm:$0xf]
        %v1457 = vld [vmem:[%s884 + $0x10] sm:$0xf]
        %v1458 = vld [vmem:[%s884 + $0x14] sm:$0xf]
        %v1459 = vld [vmem:[%s884 + $0x18] sm:$0xf]
        %v1460 = vld [vmem:[%s884 + $0x1c] sm:$0xf]
        %v1461 = vld [vmem:[%s884 + $0x20] sm:$0xf]
        %v1462 = vld [vmem:[%s884 + $0x24] sm:$0xf]
        %v1463 = vld [vmem:[%s884 + $0x28] sm:$0xf]
        %v1464 = vld [vmem:[%s884 + $0x2c] sm:$0xf]
        %v1465 = vld [vmem:[%s884 + $0x30] sm:$0xf]
        %v1466 = vld [vmem:[%s884 + $0x34] sm:$0xf]
        %v1467 = vld [vmem:[%s884 + $0x38] sm:$0xf]
        %v1468 = vld [vmem:[%s884 + $0x3c] sm:$0xf]
        %v1469 = vpack.c.bf16 %v1452, %v1451
        %v1470 = vld [vmem:[%s887] sm:$0x1]
        %v1472 = vperm.slane %v1470, 0
        %v1490 = vunpack.c.l.b16 %v1453
        %v1491 = vunpack.c.l.b16 %v1454
        %v1492 = vunpack.c.l.b16 %v1455
        %v1493 = vunpack.c.l.b16 %v1456
        %v1494 = vunpack.c.l.b16 %v1457
        %v1495 = vunpack.c.l.b16 %v1458
        %v1496 = vunpack.c.l.b16 %v1459
        %v1497 = vunpack.c.l.b16 %v1460
        %v1498 = vunpack.c.l.b16 %v1461
        %v1499 = vunpack.c.l.b16 %v1462
        %v1500 = vunpack.c.l.b16 %v1463
        %v1501 = vunpack.c.l.b16 %v1464
        %v1502 = vunpack.c.l.b16 %v1465
        %v1503 = vunpack.c.l.b16 %v1466
        %v1504 = vunpack.c.l.b16 %v1467
        %v1505 = vunpack.c.l.b16 %v1468
        %v1506 = vpack.c.b16 %v1491, %v1490
        %v1507 = vpack.c.b16 %v1493, %v1492
        %v1508 = vpack.c.b16 %v1495, %v1494
        %v1509 = vpack.c.b16 %v1497, %v1496
        %v1510 = vpack.c.b16 %v1499, %v1498
        %v1511 = vpack.c.b16 %v1501, %v1500
        %v1512 = vpack.c.b16 %v1503, %v1502
        %v1513 = vpack.c.b16 %v1505, %v1504
        %1522 = vmatpush.bf16.msra.mxu0 %v1513
        %1523 = vmatpush.bf16.msra.mxu0 %v1512
        %1524 = vmatpush.bf16.msra.mxu0 %v1511
        %1525 = vmatpush.bf16.msra.mxu0 %v1510
        %1526 = vmatpush.bf16.msra.mxu0 %v1509
        %1527 = vmatpush.bf16.msra.mxu0 %v1508
        %1528 = vmatpush.bf16.msra.mxu0 %v1507
        %1529 = vmatpush.bf16.msra.mxu0 %v1506
        %1530 = vmatmul.bf16.gmra.mxu0 %v1469
        %v1531 = vpop.f32.mrf.mxu0
        %v1532 = vadd.f32 %v1472, %v1531
        %v1533 = vpop.f32.mrf.mxu0
        %v1534 = vadd.f32 %v1472, %v1533
        %1535 = vdwg.mxu0
        %v1536 = vadd.f32 %v1532, %v975
        %v1537 = vadd.f32 %v1534, %v976
        %v1538 = vld [vmem:[%s890] sm:$0x1]
        %v1539 = vld [vmem:[%s893] sm:$0x1]
        %1540 = vadd.xlane.f32.xlu0 %v1536
        %v1541 = vpop.xlane.xlu0 %1540
        %1542 = vadd.xlane.f32.xlu0 %v1537
        %v1543 = vpop.xlane.xlu0 %1542
        %v1544 = vrcp.pop 128.0
        %v1545 = vmul.f32 128.0, %v1544
        %v1546 = vsub.f32 1.0, %v1545
        %v1547 = vmul.f32 %v1544, %v1546
        %v1548 = vadd.f32 %v1544, %v1547
        %vm1549 = vweird.f32 %v1544
        %v1550 = vsel %vm1549, %v1544, %v1548
        %v1551 = vmul.f32 %v1541, %v1550
        %v1552 = vmul.f32 %v1543, %v1550
        %v1553 = vsub.f32 %v1536, %v1551
        %v1554 = vsub.f32 %v1537, %v1552
        %v1555 = vmul.f32 %v1553, %v1553
        %v1556 = vmul.f32 %v1554, %v1554
        %1557 = vadd.xlane.f32.xlu0 %v1555
        %v1558 = vpop.xlane.xlu0 %1557
        %1559 = vadd.xlane.f32.xlu0 %v1556
        %v1560 = vpop.xlane.xlu0 %1559
        %v1561 = vmul.f32 %v1558, %v1550
        %v1562 = vmul.f32 %v1560, %v1550
        %v1563 = vadd.f32 %v1561, 1e-12
        %v1564 = vadd.f32 %v1562, 1e-12
        %v1565 = vrsqrt.pop %v1563
        %v1566 = vmul.f32 %v1565, %v1563
        %v1567 = vmul.f32 %v1566, %v1565
        %v1568 = vmul.f32 0.5, %v1567
        %v1569 = vsub.f32 1.5, %v1568
        %v1570 = vmul.f32 %v1565, %v1569
        %vm1571 = vweird.f32 %v1563
        %vm1572 = vweird.f32 %v1565
        %vm1573 = vmor %vm1571, %vm1572
        %v1574 = vsel %vm1573, %v1565, %v1570
        %v1575 = vrsqrt.pop %v1564
        %v1576 = vmul.f32 %v1575, %v1564
        %v1577 = vmul.f32 %v1576, %v1575
        %v1578 = vmul.f32 0.5, %v1577
        %v1579 = vsub.f32 1.5, %v1578
        %v1580 = vmul.f32 %v1575, %v1579
        %vm1581 = vweird.f32 %v1564
        %vm1582 = vweird.f32 %v1575
        %vm1583 = vmor %vm1581, %vm1582
        %v1584 = vsel %vm1583, %v1575, %v1580
        %v1585 = vmul.f32 %v1553, %v1574
        %v1586 = vmul.f32 %v1554, %v1584
        %v1588 = vperm.slane %v1538, 0
        %v1590 = vmul.f32 %v1585, %v1588
        %v1591 = vmul.f32 %v1586, %v1588
        %v1593 = vperm.slane %v1539, 0
        %v1595 = vadd.f32 %v1590, %v1593
        %v1596 = vadd.f32 %v1591, %v1593
        %v1597 = vld [vmem:[%s768] sm:$0xff]
        %v1598 = vld [vmem:[%s768 + $0x8] sm:$0xff]
        %v1599 = vld [vmem:[%s768 + $0x10] sm:$0xff]
        %v1600 = vld [vmem:[%s768 + $0x18] sm:$0xff]
        %v1601 = vld [vmem:[%s768 + $0x20] sm:$0xff]
        %v1602 = vld [vmem:[%s768 + $0x28] sm:$0xff]
        %v1603 = vld [vmem:[%s768 + $0x30] sm:$0xff]
        %v1604 = vld [vmem:[%s768 + $0x38] sm:$0xff]
        %v1605 = vld [vmem:[%s768 + $0x40] sm:$0xff]
        %v1606 = vld [vmem:[%s768 + $0x48] sm:$0xff]
        %v1607 = vld [vmem:[%s768 + $0x50] sm:$0xff]
        %v1608 = vld [vmem:[%s768 + $0x58] sm:$0xff]
        %v1609 = vld [vmem:[%s768 + $0x60] sm:$0xff]
        %v1610 = vld [vmem:[%s768 + $0x68] sm:$0xff]
        %v1611 = vld [vmem:[%s768 + $0x70] sm:$0xff]
        %v1612 = vld [vmem:[%s768 + $0x78] sm:$0xff]
        %v1613 = vld [vmem:[%s768 + $0x80] sm:$0xff]
        %v1614 = vld [vmem:[%s768 + $0x88] sm:$0xff]
        %v1615 = vld [vmem:[%s768 + $0x90] sm:$0xff]
        %v1616 = vld [vmem:[%s768 + $0x98] sm:$0xff]
        %v1617 = vld [vmem:[%s768 + $0xa0] sm:$0xff]
        %v1618 = vld [vmem:[%s768 + $0xa8] sm:$0xff]
        %v1619 = vld [vmem:[%s768 + $0xb0] sm:$0xff]
        %v1620 = vld [vmem:[%s768 + $0xb8] sm:$0xff]
        %v1621 = vld [vmem:[%s768 + $0xc0] sm:$0xff]
        %v1622 = vld [vmem:[%s768 + $0xc8] sm:$0xff]
        %v1623 = vld [vmem:[%s768 + $0xd0] sm:$0xff]
        %v1624 = vld [vmem:[%s768 + $0xd8] sm:$0xff]
        %v1625 = vld [vmem:[%s768 + $0xe0] sm:$0xff]
        %v1626 = vld [vmem:[%s768 + $0xe8] sm:$0xff]
        %v1627 = vld [vmem:[%s768 + $0xf0] sm:$0xff]
        %v1628 = vld [vmem:[%s768 + $0xf8] sm:$0xff]
        %v1629 = vpack.c.bf16 %v1596, %v1595
        %v1630 = vld [vmem:[%s897] sm:$0xf]
        %v1632 = vperm.slane %v1630, 0
        %v1633 = vperm.slane %v1630, 1
        %v1634 = vperm.slane %v1630, 2
        %v1635 = vperm.slane %v1630, 3
        %v1672 = vunpack.c.l.b16 %v1597
        %v1673 = vunpack.c.h.b16 %v1597
        %v1674 = vunpack.c.l.b16 %v1598
        %v1675 = vunpack.c.h.b16 %v1598
        %v1676 = vunpack.c.l.b16 %v1599
        %v1677 = vunpack.c.h.b16 %v1599
        %v1678 = vunpack.c.l.b16 %v1600
        %v1679 = vunpack.c.h.b16 %v1600
        %v1680 = vunpack.c.l.b16 %v1601
        %v1681 = vunpack.c.h.b16 %v1601
        %v1682 = vunpack.c.l.b16 %v1602
        %v1683 = vunpack.c.h.b16 %v1602
        %v1684 = vunpack.c.l.b16 %v1603
        %v1685 = vunpack.c.h.b16 %v1603
        %v1686 = vunpack.c.l.b16 %v1604
        %v1687 = vunpack.c.h.b16 %v1604
        %v1688 = vunpack.c.l.b16 %v1605
        %v1689 = vunpack.c.h.b16 %v1605
        %v1690 = vunpack.c.l.b16 %v1606
        %v1691 = vunpack.c.h.b16 %v1606
        %v1692 = vunpack.c.l.b16 %v1607
        %v1693 = vunpack.c.h.b16 %v1607
        %v1694 = vunpack.c.l.b16 %v1608
        %v1695 = vunpack.c.h.b16 %v1608
        %v1696 = vunpack.c.l.b16 %v1609
        %v1697 = vunpack.c.h.b16 %v1609
        %v1698 = vunpack.c.l.b16 %v1610
        %v1699 = vunpack.c.h.b16 %v1610
        %v1700 = vunpack.c.l.b16 %v1611
        %v1701 = vunpack.c.h.b16 %v1611
        %v1702 = vunpack.c.l.b16 %v1612
        %v1703 = vunpack.c.h.b16 %v1612
        %v1704 = vunpack.c.l.b16 %v1613
        %v1705 = vunpack.c.h.b16 %v1613
        %v1706 = vunpack.c.l.b16 %v1614
        %v1707 = vunpack.c.h.b16 %v1614
        %v1708 = vunpack.c.l.b16 %v1615
        %v1709 = vunpack.c.h.b16 %v1615
        %v1710 = vunpack.c.l.b16 %v1616
        %v1711 = vunpack.c.h.b16 %v1616
        %v1712 = vunpack.c.l.b16 %v1617
        %v1713 = vunpack.c.h.b16 %v1617
        %v1714 = vunpack.c.l.b16 %v1618
        %v1715 = vunpack.c.h.b16 %v1618
        %v1716 = vunpack.c.l.b16 %v1619
        %v1717 = vunpack.c.h.b16 %v1619
        %v1718 = vunpack.c.l.b16 %v1620
        %v1719 = vunpack.c.h.b16 %v1620
        %v1720 = vunpack.c.l.b16 %v1621
        %v1721 = vunpack.c.h.b16 %v1621
        %v1722 = vunpack.c.l.b16 %v1622
        %v1723 = vunpack.c.h.b16 %v1622
        %v1724 = vunpack.c.l.b16 %v1623
        %v1725 = vunpack.c.h.b16 %v1623
        %v1726 = vunpack.c.l.b16 %v1624
        %v1727 = vunpack.c.h.b16 %v1624
        %v1728 = vunpack.c.l.b16 %v1625
        %v1729 = vunpack.c.h.b16 %v1625
        %v1730 = vunpack.c.l.b16 %v1626
        %v1731 = vunpack.c.h.b16 %v1626
        %v1732 = vunpack.c.l.b16 %v1627
        %v1733 = vunpack.c.h.b16 %v1627
        %v1734 = vunpack.c.l.b16 %v1628
        %v1735 = vunpack.c.h.b16 %v1628
        %v1736 = vpack.c.b16 %v1676, %v1672
        %v1737 = vpack.c.b16 %v1677, %v1673
        %v1738 = vpack.c.b16 %v1678, %v1674
        %v1739 = vpack.c.b16 %v1679, %v1675
        %v1740 = vpack.c.b16 %v1684, %v1680
        %v1741 = vpack.c.b16 %v1685, %v1681
        %v1742 = vpack.c.b16 %v1686, %v1682
        %v1743 = vpack.c.b16 %v1687, %v1683
        %v1744 = vpack.c.b16 %v1692, %v1688
        %v1745 = vpack.c.b16 %v1693, %v1689
        %v1746 = vpack.c.b16 %v1694, %v1690
        %v1747 = vpack.c.b16 %v1695, %v1691
        %v1748 = vpack.c.b16 %v1700, %v1696
        %v1749 = vpack.c.b16 %v1701, %v1697
        %v1750 = vpack.c.b16 %v1702, %v1698
        %v1751 = vpack.c.b16 %v1703, %v1699
        %v1752 = vpack.c.b16 %v1708, %v1704
        %v1753 = vpack.c.b16 %v1709, %v1705
        %v1754 = vpack.c.b16 %v1710, %v1706
        %v1755 = vpack.c.b16 %v1711, %v1707
        %v1756 = vpack.c.b16 %v1716, %v1712
        %v1757 = vpack.c.b16 %v1717, %v1713
        %v1758 = vpack.c.b16 %v1718, %v1714
        %v1759 = vpack.c.b16 %v1719, %v1715
        %v1760 = vpack.c.b16 %v1724, %v1720
        %v1761 = vpack.c.b16 %v1725, %v1721
        %v1762 = vpack.c.b16 %v1726, %v1722
        %v1763 = vpack.c.b16 %v1727, %v1723
        %v1764 = vpack.c.b16 %v1732, %v1728
        %v1765 = vpack.c.b16 %v1733, %v1729
        %v1766 = vpack.c.b16 %v1734, %v1730
        %v1767 = vpack.c.b16 %v1735, %v1731
        %1800 = vmatpush.bf16.msra.mxu0 %v1764
        %1801 = vmatpush.bf16.msra.mxu0 %v1760
        %1802 = vmatpush.bf16.msra.mxu0 %v1756
        %1803 = vmatpush.bf16.msra.mxu0 %v1752
        %1804 = vmatpush.bf16.msra.mxu0 %v1748
        %1805 = vmatpush.bf16.msra.mxu0 %v1744
        %1806 = vmatpush.bf16.msra.mxu0 %v1740
        %1807 = vmatpush.bf16.msra.mxu0 %v1736
        %1808 = vmatmul.bf16.gmra.mxu0 %v1629
        %v1809 = vpop.f32.mrf.mxu0
        %v1810 = vadd.f32 %v1632, %v1809
        %v1811 = vpop.f32.mrf.mxu0
        %v1812 = vadd.f32 %v1632, %v1811
        %1813 = vdwg.mxu0
        %1814 = vmatpush.bf16.msra.mxu0 %v1765
        %1815 = vmatpush.bf16.msra.mxu0 %v1761
        %1816 = vmatpush.bf16.msra.mxu0 %v1757
        %1817 = vmatpush.bf16.msra.mxu0 %v1753
        %1818 = vmatpush.bf16.msra.mxu0 %v1749
        %1819 = vmatpush.bf16.msra.mxu0 %v1745
        %1820 = vmatpush.bf16.msra.mxu0 %v1741
        %1821 = vmatpush.bf16.msra.mxu0 %v1737
        %1822 = vmatmul.bf16.gmra.mxu0 %v1629
        %v1823 = vpop.f32.mrf.mxu0
        %v1824 = vadd.f32 %v1633, %v1823
        %v1825 = vpop.f32.mrf.mxu0
        %v1826 = vadd.f32 %v1633, %v1825
        %1827 = vdwg.mxu0
        %1828 = vmatpush.bf16.msra.mxu0 %v1766
        %1829 = vmatpush.bf16.msra.mxu0 %v1762
        %1830 = vmatpush.bf16.msra.mxu0 %v1758
        %1831 = vmatpush.bf16.msra.mxu0 %v1754
        %1832 = vmatpush.bf16.msra.mxu0 %v1750
        %1833 = vmatpush.bf16.msra.mxu0 %v1746
        %1834 = vmatpush.bf16.msra.mxu0 %v1742
        %1835 = vmatpush.bf16.msra.mxu0 %v1738
        %1836 = vmatmul.bf16.gmra.mxu0 %v1629
        %v1837 = vpop.f32.mrf.mxu0
        %v1838 = vadd.f32 %v1634, %v1837
        %v1839 = vpop.f32.mrf.mxu0
        %v1840 = vadd.f32 %v1634, %v1839
        %1841 = vdwg.mxu0
        %1842 = vmatpush.bf16.msra.mxu0 %v1767
        %1843 = vmatpush.bf16.msra.mxu0 %v1763
        %1844 = vmatpush.bf16.msra.mxu0 %v1759
        %1845 = vmatpush.bf16.msra.mxu0 %v1755
        %1846 = vmatpush.bf16.msra.mxu0 %v1751
        %1847 = vmatpush.bf16.msra.mxu0 %v1747
        %1848 = vmatpush.bf16.msra.mxu0 %v1743
        %1849 = vmatpush.bf16.msra.mxu0 %v1739
        %1850 = vmatmul.bf16.gmra.mxu0 %v1629
        %v1851 = vpop.f32.mrf.mxu0
        %v1852 = vadd.f32 %v1635, %v1851
        %v1853 = vpop.f32.mrf.mxu0
        %v1854 = vadd.f32 %v1635, %v1853
        %1855 = vdwg.mxu0
        %v1856 = vmul.f32 %v1810, %v1810
        %v1857 = vmul.f32 %v1824, %v1824
        %v1858 = vmul.f32 %v1838, %v1838
        %v1859 = vmul.f32 %v1852, %v1852
        %v1860 = vmul.f32 %v1812, %v1812
        %v1861 = vmul.f32 %v1826, %v1826
        %v1862 = vmul.f32 %v1840, %v1840
        %v1863 = vmul.f32 %v1854, %v1854
        %v1864 = vmul.f32 %v1810, %v1856
        %v1865 = vmul.f32 %v1824, %v1857
        %v1866 = vmul.f32 %v1838, %v1858
        %v1867 = vmul.f32 %v1852, %v1859
        %v1868 = vmul.f32 %v1812, %v1860
        %v1869 = vmul.f32 %v1826, %v1861
        %v1870 = vmul.f32 %v1840, %v1862
        %v1871 = vmul.f32 %v1854, %v1863
        %v1872 = vmul.f32 %v1864, 0.044715
        %v1873 = vmul.f32 %v1865, 0.044715
        %v1874 = vmul.f32 %v1866, 0.044715
        %v1875 = vmul.f32 %v1867, 0.044715
        %v1876 = vmul.f32 %v1868, 0.044715
        %v1877 = vmul.f32 %v1869, 0.044715
        %v1878 = vmul.f32 %v1870, 0.044715
        %v1879 = vmul.f32 %v1871, 0.044715
        %v1880 = vadd.f32 %v1810, %v1872
        %v1881 = vadd.f32 %v1824, %v1873
        %v1882 = vadd.f32 %v1838, %v1874
        %v1883 = vadd.f32 %v1852, %v1875
        %v1884 = vadd.f32 %v1812, %v1876
        %v1885 = vadd.f32 %v1826, %v1877
        %v1886 = vadd.f32 %v1840, %v1878
        %v1887 = vadd.f32 %v1854, %v1879
        %v1888 = vmul.f32 %v1880, 0.7978846
        %v1889 = vmul.f32 %v1881, 0.7978846
        %v1890 = vmul.f32 %v1882, 0.7978846
        %v1891 = vmul.f32 %v1883, 0.7978846
        %v1892 = vmul.f32 %v1884, 0.7978846
        %v1893 = vmul.f32 %v1885, 0.7978846
        %v1894 = vmul.f32 %v1886, 0.7978846
        %v1895 = vmul.f32 %v1887, 0.7978846
        %v1896 = vtanh.pop %v1888
        %v1897 = vtanh.pop %v1889
        %v1898 = vtanh.pop %v1890
        %v1899 = vtanh.pop %v1891
        %v1900 = vtanh.pop %v1892
        %v1901 = vtanh.pop %v1893
        %v1902 = vtanh.pop %v1894
        %v1903 = vtanh.pop %v1895
        %v1904 = vadd.f32 %v1896, 1.0
        %v1905 = vadd.f32 %v1897, 1.0
        %v1906 = vadd.f32 %v1898, 1.0
        %v1907 = vadd.f32 %v1899, 1.0
        %v1908 = vadd.f32 %v1900, 1.0
        %v1909 = vadd.f32 %v1901, 1.0
        %v1910 = vadd.f32 %v1902, 1.0
        %v1911 = vadd.f32 %v1903, 1.0
        %v1912 = vmul.f32 %v1904, 0.5
        %v1913 = vmul.f32 %v1905, 0.5
        %v1914 = vmul.f32 %v1906, 0.5
        %v1915 = vmul.f32 %v1907, 0.5
        %v1916 = vmul.f32 %v1908, 0.5
        %v1917 = vmul.f32 %v1909, 0.5
        %v1918 = vmul.f32 %v1910, 0.5
        %v1919 = vmul.f32 %v1911, 0.5
        %v1920 = vmul.f32 %v1810, %v1912
        %v1921 = vmul.f32 %v1824, %v1913
        %v1922 = vmul.f32 %v1838, %v1914
        %v1923 = vmul.f32 %v1852, %v1915
        %v1924 = vmul.f32 %v1812, %v1916
        %v1925 = vmul.f32 %v1826, %v1917
        %v1926 = vmul.f32 %v1840, %v1918
        %v1927 = vmul.f32 %v1854, %v1919
        %v1928 = vld [vmem:[%s778] sm:$0xf]
        %v1929 = vld [vmem:[%s778 + $0x4] sm:$0xf]
        %v1930 = vld [vmem:[%s778 + $0x8] sm:$0xf]
        %v1931 = vld [vmem:[%s778 + $0xc] sm:$0xf]
        %v1932 = vld [vmem:[%s778 + $0x10] sm:$0xf]
        %v1933 = vld [vmem:[%s778 + $0x14] sm:$0xf]
        %v1934 = vld [vmem:[%s778 + $0x18] sm:$0xf]
        %v1935 = vld [vmem:[%s778 + $0x1c] sm:$0xf]
        %v1936 = vld [vmem:[%s778 + $0x20] sm:$0xf]
        %v1937 = vld [vmem:[%s778 + $0x24] sm:$0xf]
        %v1938 = vld [vmem:[%s778 + $0x28] sm:$0xf]
        %v1939 = vld [vmem:[%s778 + $0x2c] sm:$0xf]
        %v1940 = vld [vmem:[%s778 + $0x30] sm:$0xf]
        %v1941 = vld [vmem:[%s778 + $0x34] sm:$0xf]
        %v1942 = vld [vmem:[%s778 + $0x38] sm:$0xf]
        %v1943 = vld [vmem:[%s778 + $0x3c] sm:$0xf]
        %v1944 = vld [vmem:[%s778 + $0x40] sm:$0xf]
        %v1945 = vld [vmem:[%s778 + $0x44] sm:$0xf]
        %v1946 = vld [vmem:[%s778 + $0x48] sm:$0xf]
        %v1947 = vld [vmem:[%s778 + $0x4c] sm:$0xf]
        %v1948 = vld [vmem:[%s778 + $0x50] sm:$0xf]
        %v1949 = vld [vmem:[%s778 + $0x54] sm:$0xf]
        %v1950 = vld [vmem:[%s778 + $0x58] sm:$0xf]
        %v1951 = vld [vmem:[%s778 + $0x5c] sm:$0xf]
        %v1952 = vld [vmem:[%s778 + $0x60] sm:$0xf]
        %v1953 = vld [vmem:[%s778 + $0x64] sm:$0xf]
        %v1954 = vld [vmem:[%s778 + $0x68] sm:$0xf]
        %v1955 = vld [vmem:[%s778 + $0x6c] sm:$0xf]
        %v1956 = vld [vmem:[%s778 + $0x70] sm:$0xf]
        %v1957 = vld [vmem:[%s778 + $0x74] sm:$0xf]
        %v1958 = vld [vmem:[%s778 + $0x78] sm:$0xf]
        %v1959 = vld [vmem:[%s778 + $0x7c] sm:$0xf]
        %v1960 = vld [vmem:[%s778 + $0x80] sm:$0xf]
        %v1961 = vld [vmem:[%s778 + $0x84] sm:$0xf]
        %v1962 = vld [vmem:[%s778 + $0x88] sm:$0xf]
        %v1963 = vld [vmem:[%s778 + $0x8c] sm:$0xf]
        %v1964 = vld [vmem:[%s778 + $0x90] sm:$0xf]
        %v1965 = vld [vmem:[%s778 + $0x94] sm:$0xf]
        %v1966 = vld [vmem:[%s778 + $0x98] sm:$0xf]
        %v1967 = vld [vmem:[%s778 + $0x9c] sm:$0xf]
        %v1968 = vld [vmem:[%s778 + $0xa0] sm:$0xf]
        %v1969 = vld [vmem:[%s778 + $0xa4] sm:$0xf]
        %v1970 = vld [vmem:[%s778 + $0xa8] sm:$0xf]
        %v1971 = vld [vmem:[%s778 + $0xac] sm:$0xf]
        %v1972 = vld [vmem:[%s778 + $0xb0] sm:$0xf]
        %v1973 = vld [vmem:[%s778 + $0xb4] sm:$0xf]
        %v1974 = vld [vmem:[%s778 + $0xb8] sm:$0xf]
        %v1975 = vld [vmem:[%s778 + $0xbc] sm:$0xf]
        %v1976 = vld [vmem:[%s778 + $0xc0] sm:$0xf]
        %v1977 = vld [vmem:[%s778 + $0xc4] sm:$0xf]
        %v1978 = vld [vmem:[%s778 + $0xc8] sm:$0xf]
        %v1979 = vld [vmem:[%s778 + $0xcc] sm:$0xf]
        %v1980 = vld [vmem:[%s778 + $0xd0] sm:$0xf]
        %v1981 = vld [vmem:[%s778 + $0xd4] sm:$0xf]
        %v1982 = vld [vmem:[%s778 + $0xd8] sm:$0xf]
        %v1983 = vld [vmem:[%s778 + $0xdc] sm:$0xf]
        %v1984 = vld [vmem:[%s778 + $0xe0] sm:$0xf]
        %v1985 = vld [vmem:[%s778 + $0xe4] sm:$0xf]
        %v1986 = vld [vmem:[%s778 + $0xe8] sm:$0xf]
        %v1987 = vld [vmem:[%s778 + $0xec] sm:$0xf]
        %v1988 = vld [vmem:[%s778 + $0xf0] sm:$0xf]
        %v1989 = vld [vmem:[%s778 + $0xf4] sm:$0xf]
        %v1990 = vld [vmem:[%s778 + $0xf8] sm:$0xf]
        %v1991 = vld [vmem:[%s778 + $0xfc] sm:$0xf]
        %v1992 = vpack.c.bf16 %v1924, %v1920
        %v1993 = vpack.c.bf16 %v1925, %v1921
        %v1994 = vpack.c.bf16 %v1926, %v1922
        %v1995 = vpack.c.bf16 %v1927, %v1923
        %v1996 = vld [vmem:[%s900] sm:$0x1]
        %v1998 = vperm.slane %v1996, 0
        %v2064 = vunpack.c.l.b16 %v1928
        %v2065 = vunpack.c.l.b16 %v1929
        %v2066 = vunpack.c.l.b16 %v1930
        %v2067 = vunpack.c.l.b16 %v1931
        %v2068 = vunpack.c.l.b16 %v1932
        %v2069 = vunpack.c.l.b16 %v1933
        %v2070 = vunpack.c.l.b16 %v1934
        %v2071 = vunpack.c.l.b16 %v1935
        %v2072 = vunpack.c.l.b16 %v1936
        %v2073 = vunpack.c.l.b16 %v1937
        %v2074 = vunpack.c.l.b16 %v1938
        %v2075 = vunpack.c.l.b16 %v1939
        %v2076 = vunpack.c.l.b16 %v1940
        %v2077 = vunpack.c.l.b16 %v1941
        %v2078 = vunpack.c.l.b16 %v1942
        %v2079 = vunpack.c.l.b16 %v1943
        %v2080 = vunpack.c.l.b16 %v1944
        %v2081 = vunpack.c.l.b16 %v1945
        %v2082 = vunpack.c.l.b16 %v1946
        %v2083 = vunpack.c.l.b16 %v1947
        %v2084 = vunpack.c.l.b16 %v1948
        %v2085 = vunpack.c.l.b16 %v1949
        %v2086 = vunpack.c.l.b16 %v1950
        %v2087 = vunpack.c.l.b16 %v1951
        %v2088 = vunpack.c.l.b16 %v1952
        %v2089 = vunpack.c.l.b16 %v1953
        %v2090 = vunpack.c.l.b16 %v1954
        %v2091 = vunpack.c.l.b16 %v1955
        %v2092 = vunpack.c.l.b16 %v1956
        %v2093 = vunpack.c.l.b16 %v1957
        %v2094 = vunpack.c.l.b16 %v1958
        %v2095 = vunpack.c.l.b16 %v1959
        %v2096 = vunpack.c.l.b16 %v1960
        %v2097 = vunpack.c.l.b16 %v1961
        %v2098 = vunpack.c.l.b16 %v1962
        %v2099 = vunpack.c.l.b16 %v1963
        %v2100 = vunpack.c.l.b16 %v1964
        %v2101 = vunpack.c.l.b16 %v1965
        %v2102 = vunpack.c.l.b16 %v1966
        %v2103 = vunpack.c.l.b16 %v1967
        %v2104 = vunpack.c.l.b16 %v1968
        %v2105 = vunpack.c.l.b16 %v1969
        %v2106 = vunpack.c.l.b16 %v1970
        %v2107 = vunpack.c.l.b16 %v1971
        %v2108 = vunpack.c.l.b16 %v1972
        %v2109 = vunpack.c.l.b16 %v1973
        %v2110 = vunpack.c.l.b16 %v1974
        %v2111 = vunpack.c.l.b16 %v1975
        %v2112 = vunpack.c.l.b16 %v1976
        %v2113 = vunpack.c.l.b16 %v1977
        %v2114 = vunpack.c.l.b16 %v1978
        %v2115 = vunpack.c.l.b16 %v1979
        %v2116 = vunpack.c.l.b16 %v1980
        %v2117 = vunpack.c.l.b16 %v1981
        %v2118 = vunpack.c.l.b16 %v1982
        %v2119 = vunpack.c.l.b16 %v1983
        %v2120 = vunpack.c.l.b16 %v1984
        %v2121 = vunpack.c.l.b16 %v1985
        %v2122 = vunpack.c.l.b16 %v1986
        %v2123 = vunpack.c.l.b16 %v1987
        %v2124 = vunpack.c.l.b16 %v1988
        %v2125 = vunpack.c.l.b16 %v1989
        %v2126 = vunpack.c.l.b16 %v1990
        %v2127 = vunpack.c.l.b16 %v1991
        %v2128 = vpack.c.b16 %v2065, %v2064
        %v2129 = vpack.c.b16 %v2067, %v2066
        %v2130 = vpack.c.b16 %v2069, %v2068
        %v2131 = vpack.c.b16 %v2071, %v2070
        %v2132 = vpack.c.b16 %v2073, %v2072
        %v2133 = vpack.c.b16 %v2075, %v2074
        %v2134 = vpack.c.b16 %v2077, %v2076
        %v2135 = vpack.c.b16 %v2079, %v2078
        %v2136 = vpack.c.b16 %v2081, %v2080
        %v2137 = vpack.c.b16 %v2083, %v2082
        %v2138 = vpack.c.b16 %v2085, %v2084
        %v2139 = vpack.c.b16 %v2087, %v2086
        %v2140 = vpack.c.b16 %v2089, %v2088
        %v2141 = vpack.c.b16 %v2091, %v2090
        %v2142 = vpack.c.b16 %v2093, %v2092
        %v2143 = vpack.c.b16 %v2095, %v2094
        %v2144 = vpack.c.b16 %v2097, %v2096
        %v2145 = vpack.c.b16 %v2099, %v2098
        %v2146 = vpack.c.b16 %v2101, %v2100
        %v2147 = vpack.c.b16 %v2103, %v2102
        %v2148 = vpack.c.b16 %v2105, %v2104
        %v2149 = vpack.c.b16 %v2107, %v2106
        %v2150 = vpack.c.b16 %v2109, %v2108
        %v2151 = vpack.c.b16 %v2111, %v2110
        %v2152 = vpack.c.b16 %v2113, %v2112
        %v2153 = vpack.c.b16 %v2115, %v2114
        %v2154 = vpack.c.b16 %v2117, %v2116
        %v2155 = vpack.c.b16 %v2119, %v2118
        %v2156 = vpack.c.b16 %v2121, %v2120
        %v2157 = vpack.c.b16 %v2123, %v2122
        %v2158 = vpack.c.b16 %v2125, %v2124
        %v2159 = vpack.c.b16 %v2127, %v2126
        %2192 = vmatpush.bf16.msra.mxu0 %v2135
        %2193 = vmatpush.bf16.msra.mxu0 %v2134
        %2194 = vmatpush.bf16.msra.mxu0 %v2133
        %2195 = vmatpush.bf16.msra.mxu0 %v2132
        %2196 = vmatpush.bf16.msra.mxu0 %v2131
        %2197 = vmatpush.bf16.msra.mxu0 %v2130
        %2198 = vmatpush.bf16.msra.mxu0 %v2129
        %2199 = vmatpush.bf16.msra.mxu0 %v2128
        %2200 = vmatmul.bf16.gmra.mxu0 %v1992
        %v2201 = vpop.f32.mrf.mxu0
        %v2202 = vadd.f32 %v1998, %v2201
        %v2203 = vpop.f32.mrf.mxu0
        %v2204 = vadd.f32 %v1998, %v2203
        %2205 = vdwg.mxu0
        %2206 = vmatpush.bf16.msra.mxu0 %v2143
        %2207 = vmatpush.bf16.msra.mxu0 %v2142
        %2208 = vmatpush.bf16.msra.mxu0 %v2141
        %2209 = vmatpush.bf16.msra.mxu0 %v2140
        %2210 = vmatpush.bf16.msra.mxu0 %v2139
        %2211 = vmatpush.bf16.msra.mxu0 %v2138
        %2212 = vmatpush.bf16.msra.mxu0 %v2137
        %2213 = vmatpush.bf16.msra.mxu0 %v2136
        %2214 = vmatmul.bf16.gmra.mxu0 %v1993
        %v2215 = vpop.f32.mrf.mxu0
        %v2216 = vadd.f32 %v2202, %v2215
        %v2217 = vpop.f32.mrf.mxu0
        %v2218 = vadd.f32 %v2204, %v2217
        %2219 = vdwg.mxu0
        %2220 = vmatpush.bf16.msra.mxu0 %v2151
        %2221 = vmatpush.bf16.msra.mxu0 %v2150
        %2222 = vmatpush.bf16.msra.mxu0 %v2149
        %2223 = vmatpush.bf16.msra.mxu0 %v2148
        %2224 = vmatpush.bf16.msra.mxu0 %v2147
        %2225 = vmatpush.bf16.msra.mxu0 %v2146
        %2226 = vmatpush.bf16.msra.mxu0 %v2145
        %2227 = vmatpush.bf16.msra.mxu0 %v2144
        %2228 = vmatmul.bf16.gmra.mxu0 %v1994
        %v2229 = vpop.f32.mrf.mxu0
        %v2230 = vadd.f32 %v2216, %v2229
        %v2231 = vpop.f32.mrf.mxu0
        %v2232 = vadd.f32 %v2218, %v2231
        %2233 = vdwg.mxu0
        %2234 = vmatpush.bf16.msra.mxu0 %v2159
        %2235 = vmatpush.bf16.msra.mxu0 %v2158
        %2236 = vmatpush.bf16.msra.mxu0 %v2157
        %2237 = vmatpush.bf16.msra.mxu0 %v2156
        %2238 = vmatpush.bf16.msra.mxu0 %v2155
        %2239 = vmatpush.bf16.msra.mxu0 %v2154
        %2240 = vmatpush.bf16.msra.mxu0 %v2153
        %2241 = vmatpush.bf16.msra.mxu0 %v2152
        %2242 = vmatmul.bf16.gmra.mxu0 %v1995
        %v2243 = vpop.f32.mrf.mxu0
        %v2244 = vadd.f32 %v2230, %v2243
        %v2245 = vpop.f32.mrf.mxu0
        %v2246 = vadd.f32 %v2232, %v2245
        %2247 = vdwg.mxu0
        %v2248 = vadd.f32 %v2244, %v1595
        %v2249 = vadd.f32 %v2246, %v1596
        %v2250 = vld [vmem:[%s903] sm:$0x1]
        %v2251 = vld [vmem:[%s906] sm:$0x1]
        %2252 = vadd.xlane.f32.xlu0 %v2248
        %v2253 = vpop.xlane.xlu0 %2252
        %2254 = vadd.xlane.f32.xlu0 %v2249
        %v2255 = vpop.xlane.xlu0 %2254
        %v2256 = vmul.f32 %v2253, %v1550
        %v2257 = vmul.f32 %v2255, %v1550
        %v2258 = vsub.f32 %v2248, %v2256
        %v2259 = vsub.f32 %v2249, %v2257
        %v2260 = vmul.f32 %v2258, %v2258
        %v2261 = vmul.f32 %v2259, %v2259
        %2262 = vadd.xlane.f32.xlu0 %v2260
        %v2263 = vpop.xlane.xlu0 %2262
        %2264 = vadd.xlane.f32.xlu0 %v2261
        %v2265 = vpop.xlane.xlu0 %2264
        %v2266 = vmul.f32 %v2263, %v1550
        %v2267 = vmul.f32 %v2265, %v1550
        %v2268 = vadd.f32 %v2266, 1e-12
        %v2269 = vadd.f32 %v2267, 1e-12
        %v2270 = vrsqrt.pop %v2268
        %v2271 = vmul.f32 %v2270, %v2268
        %v2272 = vmul.f32 %v2271, %v2270
        %v2273 = vmul.f32 0.5, %v2272
        %v2274 = vsub.f32 1.5, %v2273
        %v2275 = vmul.f32 %v2270, %v2274
        %vm2276 = vweird.f32 %v2268
        %vm2277 = vweird.f32 %v2270
        %vm2278 = vmor %vm2276, %vm2277
        %v2279 = vsel %vm2278, %v2270, %v2275
        %v2280 = vrsqrt.pop %v2269
        %v2281 = vmul.f32 %v2280, %v2269
        %v2282 = vmul.f32 %v2281, %v2280
        %v2283 = vmul.f32 0.5, %v2282
        %v2284 = vsub.f32 1.5, %v2283
        %v2285 = vmul.f32 %v2280, %v2284
        %vm2286 = vweird.f32 %v2269
        %vm2287 = vweird.f32 %v2280
        %vm2288 = vmor %vm2286, %vm2287
        %v2289 = vsel %vm2288, %v2280, %v2285
        %v2290 = vmul.f32 %v2258, %v2279
        %v2291 = vmul.f32 %v2259, %v2289
        %v2293 = vperm.slane %v2250, 0
        %v2295 = vmul.f32 %v2290, %v2293
        %v2296 = vmul.f32 %v2291, %v2293
        %v2298 = vperm.slane %v2251, 0
        %v2300 = vadd.f32 %v2295, %v2298
        %v2301 = vadd.f32 %v2296, %v2298
        %2302 = vst [vmem:[#allocation2] sm:$0xff] %v2300
        %2303 = vst [vmem:[#allocation2 + $0x8] sm:$0xff] %v2301
        %p2304 = scmp.eq.s32.totalorder %s42, 1
        // Predicated region
        $region117: #{bert_classficator_forward.1} parent=99 // pred_check
          %p2305 = pneg %p2304
        $region118: #{bert_classficator_forward.1} parent=99 // pred_check_branch
          %2307 = sbr.rel (%p2305) target = $region120
        $region119: #{bert_classficator_forward.1} parent=99 // pred_region
          %2308 = vst [vmem:[#allocation9] sm:$0xff] %v2300
          %2309 = vst [vmem:[#allocation9 + $0x8] sm:$0xff] %v2301
          %v2310 = vld [vmem:[%s16] sm:$0xf]
          %v2311 = vld [vmem:[%s16 + $0x4] sm:$0xf]
          %v2312 = vld [vmem:[%s16 + $0x8] sm:$0xf]
          %v2313 = vld [vmem:[%s16 + $0xc] sm:$0xf]
          %v2314 = vld [vmem:[%s16 + $0x10] sm:$0xf]
          %v2315 = vld [vmem:[%s16 + $0x14] sm:$0xf]
          %v2316 = vld [vmem:[%s16 + $0x18] sm:$0xf]
          %v2317 = vld [vmem:[%s16 + $0x1c] sm:$0xf]
          %v2318 = vld [vmem:[%s16 + $0x20] sm:$0xf]
          %v2319 = vld [vmem:[%s16 + $0x24] sm:$0xf]
          %v2320 = vld [vmem:[%s16 + $0x28] sm:$0xf]
          %v2321 = vld [vmem:[%s16 + $0x2c] sm:$0xf]
          %v2322 = vld [vmem:[%s16 + $0x30] sm:$0xf]
          %v2323 = vld [vmem:[%s16 + $0x34] sm:$0xf]
          %v2324 = vld [vmem:[%s16 + $0x38] sm:$0xf]
          %v2325 = vld [vmem:[%s16 + $0x3c] sm:$0xf]
          %v2326 = vpack.c.bf16 %v2300, %v2300
          %v2327 = vpack.c.bf16 %v2301, %v2301
          %v2328 = vld [vmem:[%s17] sm:$0x1]
          %v2330 = vperm.slane %v2328, 0
          %v2334 = vunpack.c.l.b16 %v2326
          %v2335 = vunpack.c.l.b16 %v2327
          %v2336 = vrot.slane %v2335, 7
          %vm2337 = vcmask 1041409
          %v2338 = vsel %vm2337, %v2336, %v2334
          %v2339 = vpack.c.b16 %v2338, %v2338
          %v2357 = vunpack.c.l.b16 %v2310
          %v2358 = vunpack.c.l.b16 %v2311
          %v2359 = vunpack.c.l.b16 %v2312
          %v2360 = vunpack.c.l.b16 %v2313
          %v2361 = vunpack.c.l.b16 %v2314
          %v2362 = vunpack.c.l.b16 %v2315
          %v2363 = vunpack.c.l.b16 %v2316
          %v2364 = vunpack.c.l.b16 %v2317
          %v2365 = vunpack.c.l.b16 %v2318
          %v2366 = vunpack.c.l.b16 %v2319
          %v2367 = vunpack.c.l.b16 %v2320
          %v2368 = vunpack.c.l.b16 %v2321
          %v2369 = vunpack.c.l.b16 %v2322
          %v2370 = vunpack.c.l.b16 %v2323
          %v2371 = vunpack.c.l.b16 %v2324
          %v2372 = vunpack.c.l.b16 %v2325
          %v2373 = vpack.c.b16 %v2358, %v2357
          %v2374 = vpack.c.b16 %v2360, %v2359
          %v2375 = vpack.c.b16 %v2362, %v2361
          %v2376 = vpack.c.b16 %v2364, %v2363
          %v2377 = vpack.c.b16 %v2366, %v2365
          %v2378 = vpack.c.b16 %v2368, %v2367
          %v2379 = vpack.c.b16 %v2370, %v2369
          %v2380 = vpack.c.b16 %v2372, %v2371
          %2389 = vmatpush.bf16.msra.mxu0 %v2380
          %2390 = vmatpush.bf16.msra.mxu0 %v2379
          %2391 = vmatpush.bf16.msra.mxu0 %v2378
          %2392 = vmatpush.bf16.msra.mxu0 %v2377
          %2393 = vmatpush.bf16.msra.mxu0 %v2376
          %2394 = vmatpush.bf16.msra.mxu0 %v2375
          %2395 = vmatpush.bf16.msra.mxu0 %v2374
          %2396 = vmatpush.bf16.msra.mxu0 %v2373
          %2397 = vmatmul.bf16.gmra.mxu0 %v2339
          %v2398 = vpop.f32.mrf.mxu0
          %v2399 = vadd.f32 %v2330, %v2398
          %v2400 = vpop.f32.mrf.mxu0
          %2401 = vdwg.mxu0
          %v2402 = vtanh.pop %v2399
          %2403 = vst [vmem:[#allocation10] sm:$0x3] %v2402
          %v2404 = vld [vmem:[%s18] sm:$0xf]
          %v2405 = vld [vmem:[%s18 + $0x4] sm:$0xf]
          %v2406 = vld [vmem:[%s18 + $0x8] sm:$0xf]
          %v2407 = vld [vmem:[%s18 + $0xc] sm:$0xf]
          %v2408 = vld [vmem:[%s18 + $0x10] sm:$0xf]
          %v2409 = vld [vmem:[%s18 + $0x14] sm:$0xf]
          %v2410 = vld [vmem:[%s18 + $0x18] sm:$0xf]
          %v2411 = vld [vmem:[%s18 + $0x1c] sm:$0xf]
          %v2412 = vld [vmem:[%s18 + $0x20] sm:$0xf]
          %v2413 = vld [vmem:[%s18 + $0x24] sm:$0xf]
          %v2414 = vld [vmem:[%s18 + $0x28] sm:$0xf]
          %v2415 = vld [vmem:[%s18 + $0x2c] sm:$0xf]
          %v2416 = vld [vmem:[%s18 + $0x30] sm:$0xf]
          %v2417 = vld [vmem:[%s18 + $0x34] sm:$0xf]
          %v2418 = vld [vmem:[%s18 + $0x38] sm:$0xf]
          %v2419 = vld [vmem:[%s18 + $0x3c] sm:$0xf]
          %v2420 = vpack.c.bf16 %v2402, %v2402
          %v2421 = vld [vmem:[%s19] sm:$0x1]
          %v2423 = vperm.slane %v2421, 0
          %v2441 = vunpack.c.l.b16 %v2404
          %v2442 = vunpack.c.l.b16 %v2405
          %v2443 = vunpack.c.l.b16 %v2406
          %v2444 = vunpack.c.l.b16 %v2407
          %v2445 = vunpack.c.l.b16 %v2408
          %v2446 = vunpack.c.l.b16 %v2409
          %v2447 = vunpack.c.l.b16 %v2410
          %v2448 = vunpack.c.l.b16 %v2411
          %v2449 = vunpack.c.l.b16 %v2412
          %v2450 = vunpack.c.l.b16 %v2413
          %v2451 = vunpack.c.l.b16 %v2414
          %v2452 = vunpack.c.l.b16 %v2415
          %v2453 = vunpack.c.l.b16 %v2416
          %v2454 = vunpack.c.l.b16 %v2417
          %v2455 = vunpack.c.l.b16 %v2418
          %v2456 = vunpack.c.l.b16 %v2419
          %v2457 = vpack.c.b16 %v2442, %v2441
          %v2458 = vpack.c.b16 %v2444, %v2443
          %v2459 = vpack.c.b16 %v2446, %v2445
          %v2460 = vpack.c.b16 %v2448, %v2447
          %v2461 = vpack.c.b16 %v2450, %v2449
          %v2462 = vpack.c.b16 %v2452, %v2451
          %v2463 = vpack.c.b16 %v2454, %v2453
          %v2464 = vpack.c.b16 %v2456, %v2455
          %2473 = vmatpush.bf16.msra.mxu0 %v2464
          %2474 = vmatpush.bf16.msra.mxu0 %v2463
          %2475 = vmatpush.bf16.msra.mxu0 %v2462
          %2476 = vmatpush.bf16.msra.mxu0 %v2461
          %2477 = vmatpush.bf16.msra.mxu0 %v2460
          %2478 = vmatpush.bf16.msra.mxu0 %v2459
          %2479 = vmatpush.bf16.msra.mxu0 %v2458
          %2480 = vmatpush.bf16.msra.mxu0 %v2457
          %2481 = vmatmul.bf16.gmra.mxu0 %v2420
          %v2482 = vpop.f32.mrf.mxu0
          %v2483 = vadd.f32 %v2423, %v2482
          %v2484 = vpop.f32.mrf.mxu0
          %2485 = vdwg.mxu0
          %2486 = vst [vmem:[#allocation12] sm:$0x3] %v2483
        $region120: #{bert_classficator_forward.1} parent=99 // pred_fallthru
          _
        // Predicated region
        $region121: #{bert_classficator_forward.1} parent=99 // pred_check
          %p2487 = pneg %p535
        $region122: #{bert_classficator_forward.1} parent=99 // pred_check_branch
          %2489 = sbr.rel (%p2487) target = $region124
        $region123: #{bert_classficator_forward.1} parent=99 // pred_region
          %2491 = vsyncadd [#allocation5], 0
          %s2492 = sshll.u32 [#allocation9], 4
          %s2493 = int_to_ptr.vmem [resolvable:$true] %s2492
          %s2494 = sshll.u32 %s20, 4
          %s2495 = int_to_ptr.hbm [resolvable:$true] %s2494
          %2500 = dma.vmem_to_hbm [thread:$0]  %s2493, 256, %s2495, [#allocation5], 128, 128, 8
        $region124: #{bert_classficator_forward.1} parent=99 // pred_fallthru
          _
        // Predicated region
        $region125: #{bert_classficator_forward.1} parent=99 // pred_check
          %p2501 = pneg %p556
        $region126: #{bert_classficator_forward.1} parent=99 // pred_check_branch
          %2503 = sbr.rel (%p2501) target = $region128
        $region127: #{bert_classficator_forward.1} parent=99 // pred_region
          %2505 = vsyncadd [#allocation11], 0
          %s2507 = sshll.u32 [#allocation10], 4
          %s2508 = int_to_ptr.vmem [resolvable:$true] %s2507
          %s2509 = sshll.u32 %s21, 4
          %s2510 = int_to_ptr.hbm [resolvable:$true] %s2509
          %2512 = dma.vmem_to_hbm [thread:$0]  %s2508, 32, %s2510, [#allocation11]
        $region128: #{bert_classficator_forward.1} parent=99 // pred_fallthru
          _
        // Predicated region
        $region129: #{bert_classficator_forward.1} parent=99 // pred_check
          %p2513 = pneg %p577
        $region130: #{bert_classficator_forward.1} parent=99 // pred_check_branch
          %2515 = sbr.rel (%p2513) target = $region132
        $region131: #{bert_classficator_forward.1} parent=99 // pred_region
          %2517 = vsyncadd [#allocation11], 0
          %s2519 = sshll.u32 [#allocation12], 4
          %s2520 = int_to_ptr.vmem [resolvable:$true] %s2519
          %s2521 = sshll.u32 %s22, 4
          %s2522 = int_to_ptr.hbm [resolvable:$true] %s2521
          %2524 = dma.vmem_to_hbm [thread:$0]  %s2520, 32, %s2522, [#allocation11]
        $region132: #{bert_classficator_forward.1} parent=99 // pred_fallthru
          _
        // Predicated region
        $region133: #{bert_classficator_forward.1} parent=99 // pred_check
          %p2525 = pneg %p535
        $region134: #{bert_classficator_forward.1} parent=99 // pred_check_branch
          %2527 = sbr.rel (%p2525) target = $region136
        $region135: #{bert_classficator_forward.1} parent=99 // pred_region
          %2529 = dma.done [#allocation5], 256
        $region136: #{bert_classficator_forward.1} parent=99 // pred_fallthru
          _
        // Predicated region
        $region137: #{bert_classficator_forward.1} parent=99 // pred_check
          %p2530 = pneg %p556
        $region138: #{bert_classficator_forward.1} parent=99 // pred_check_branch
          %2532 = sbr.rel (%p2530) target = $region140
        $region139: #{bert_classficator_forward.1} parent=99 // pred_region
          %2534 = dma.done [#allocation11], 32
        $region140: #{bert_classficator_forward.1} parent=99 // pred_fallthru
          _
        // Predicated region
        $region141: #{bert_classficator_forward.1} parent=99 // pred_check
          %p2535 = pneg %p577
        $region142: #{bert_classficator_forward.1} parent=99 // pred_check_branch
          %2537 = sbr.rel (%p2535) target = $region144
        $region143: #{bert_classficator_forward.1} parent=99 // pred_region
          %2539 = dma.done [#allocation11], 32
        $region144: #{bert_classficator_forward.1} parent=99 // pred_fallthru
          _
      $region100: #{bert_classficator_forward.1} parent=5 // pred_fallthru
        _
      %p2540 = scmp.le.s32.totalorder 2, %s37
      // Predicated region
      $region145: #{bert_classficator_forward.1} parent=5 // pred_check
        %p2541 = pneg %p2540
      $region146: #{bert_classficator_forward.1} parent=5 // pred_check_branch
        %2543 = sbr.rel (%p2541) target = $region148
      $region147: #{bert_classficator_forward.1} parent=5 // pred_region
        %s2544 = ssub.s32 %s37, 2
      $region148: #{bert_classficator_forward.1} parent=5 // pred_fallthru
        _
    $region6: #{bert_classficator_forward.1} parent=1 // loop_footer
      %s41 = sadd.s32 1, %s37
    $region7: #{bert_classficator_forward.1} parent=1 // loop_footer_branch
      %36 = sbr.rel target = $region3
    $region8: #{bert_classficator_forward.1} parent=1 // loop_exit
      _
    %2545 = vsyncpa [#allocation4], 1
    %s2546 = scalar_lea.sflag [#allocation4], 1
    %2547 = vsyncpa %s2546, 1
    %2548 = vsyncpa [#allocation7], 1
    %s2549 = scalar_lea.sflag [#allocation7], 1
    %2550 = vsyncpa %s2549, 1
    %2551 = vsyncpa [#allocation5], 1
    %s2552 = scalar_lea.sflag [#allocation5], 1
    %2553 = vsyncpa %s2552, 1
    %2554 = vsyncpa [#allocation11], 1

</llo_original>
